<compile_context>
chip_gen: v7x
topology: tpu7x:2x2x1
jax: 0.10.0
libtpu: 0.0.40
codegen_flags: <defaults>
</compile_context>

<pallas_src>
import jax
import jax.numpy as jnp
from jax.experimental import pallas as pl
from jax.experimental.pallas import tpu as pltpu


def parent_tree_kernel(sent_ref, h0_ref, c0_ref,
                       wpro_ref, ball_ref, wrec_ref, vtw_ref, vtb_ref,
                       parents_ref, loss_ref):
    L, D = sent_ref.shape
    D4 = 4 * D

    sent = sent_ref[...]                                             # (L, D)

    # ---- loop-invariant prologue: one fused matmul [x_gates | e1] -----------
    pro = jnp.dot(sent, wpro_ref[...], preferred_element_type=jnp.float32)     # (L, 5D)
    x_proj = pro[:, :D4] + ball_ref[...]        # (L, 4D) gate order [i,f,o,g], lane-aligned
    e1 = pro[:, D4:D4 + D]                      # (L, D)  = W1(encoder_outputs)

    wrec = wrec_ref[...]                        # (D, 5D) = [W_hh_perm.T | W2.T]
    vtw = vtw_ref[...]                          # (1, 2D) vt weight on [e1*e2 | e1-e2]
    vtb = vtb_ref[0]                            # scalar vt bias

    row_idx = jax.lax.broadcasted_iota(jnp.int32, (L, 1), 0)         # (L, 1)
    neg_big = jnp.float32(-1e30)

    parents_ref[0] = jnp.int32(0)
    parents_ref[1] = jnp.int32(0)

    h = h0_ref[...]                                                  # (1, D)
    c = c0_ref[...]                                                  # (1, D)
    loss = jnp.zeros((), jnp.float32)

    # Peel the first gate pre-activation (step ind=2) off the loop.
    gates = x_proj[2:3, :] + jnp.dot(h, wrec,
                                     preferred_element_type=jnp.float32)[:, :D4]

    # Fully unrolled decode loop (L static, 6 iterations): h/c stay in vregs,
    # static-index SMEM stores, scheduler sees across iterations.
    for ind in range(2, L):
        # --- LSTMCell nonlinearities on precomputed gates, order [i,f,o,g] ---
        sig = jax.nn.sigmoid(gates[:, 0:3 * D])                      # (1, 3D): i,f,o
        i_g = sig[:, 0:D]
        f_g = sig[:, D:2 * D]
        o_g = sig[:, 2 * D:3 * D]
        g_g = jnp.tanh(gates[:, 3 * D:4 * D])
        c = f_g * c + i_g * g_g
        h = o_g * jnp.tanh(c)

        # --- single MXU push: next-step recurrent gates + this-step e2 -------
        y = jnp.dot(h, wrec, preferred_element_type=jnp.float32)     # (1, 5D)
        e2 = y[:, D4:D4 + D]                                         # (1, D)
        if ind + 1 < L:
            gates = x_proj[ind + 1:ind + 2, :] + y[:, :D4]

        # --- attention packed: one tanh over (L, 2D), one lane reduce --------
        enc = jnp.concatenate([e1 * e2, e1 - e2], axis=-1)           # (L, 2D)
        attn = jnp.sum(jnp.tanh(enc) * vtw, axis=-1, keepdims=True) + vtb      # (L, 1)

        valid = row_idx < ind                                        # (L, 1) bool
        masked = jnp.where(valid, attn, attn - 10000.0)

        # is_test=True -> argmax of (softmax of) masked scores (first max, like torch)
        m = jnp.max(masked)
        parent = jnp.min(jnp.where(masked == m, row_idx, L)).astype(jnp.int32)

        # cross_entropy(attn[:ind], parent) = logsumexp(attn[:ind]) - attn[parent]
        # parent is the valid argmax => attn[parent] == m == max over valid prefix,
        # so the loss collapses to log(sum_valid exp(attn - m)).
        shifted = jnp.where(valid, attn - m, neg_big)                # exp(-1e30) = 0
        loss = loss + jnp.log(jnp.sum(jnp.exp(shifted)))

        parents_ref[ind] = parent

    loss_ref[0] = loss / (L - 2 + 1e-05)


def prepare_kernel_params(params):
    """One-time host-side weight prep (transposes / gate permutation / fusions).

    Torch LSTMCell gate row order is [i, f, g, o]; we permute to [i, f, o, g]
    so the kernel can apply one sigmoid over a contiguous 3D-wide slice.
    """
    W1, W2, vt_w, vt_b = params["W1"], params["W2"], params["vt_w"], params["vt_b"]
    W_ih, W_hh, b_ih, b_hh = (params["W_ih"], params["W_hh"],
                              params["b_ih"], params["b_hh"])
    D = W_ih.shape[1]

    perm = jnp.concatenate([jnp.arange(0, D), jnp.arange(D, 2 * D),
                            jnp.arange(3 * D, 4 * D), jnp.arange(2 * D, 3 * D)])
    W_ih_p = W_ih[perm]                                             # (4D, D) [i,f,o,g]
    W_hh_p = W_hh[perm]
    b_all = (b_ih + b_hh)[perm].reshape(1, 4 * D)                   # (1, 4D)

    wpro = jnp.concatenate([W_ih_p.T, W1.T], axis=1)                # (D, 5D): [x_gates | e1]
    wrec = jnp.concatenate([W_hh_p.T, W2.T], axis=1)                # (D, 5D): [h_gates | e2]
    vtw = vt_w.reshape(1, 2 * D)                                    # (1, 2D): [e1*e2 | e1-e2]
    return dict(wpro=wpro, ball=b_all, wrec=wrec, vtw=vtw, vtb=vt_b)


def parent_tree_forward(sent_encodings, h0, c0, kparams):
    """sent_encodings: (1, L, D) f32 (batch=1).  Returns (parents (L,) int32, loss scalar)."""
    L, D = sent_encodings.shape[1], sent_encodings.shape[2]
    sent = sent_encodings.reshape(L, D)

    vmem = pl.BlockSpec(memory_space=pltpu.MemorySpace.VMEM)
    smem = pl.BlockSpec(memory_space=pltpu.MemorySpace.SMEM)

    # TODO(synk): if the real workload batches many sentences, add a leading
    # "parallel" grid axis over batch (BlockSpec (1, L, D)) so v7x's second
    # TensorCore is used; the module itself is batch=1 so kept gridless here.
    parents, loss = pl.pallas_call(
        parent_tree_kernel,
        out_shape=(jax.ShapeDtypeStruct((L,), jnp.int32),
                   jax.ShapeDtypeStruct((1,), jnp.float32)),
        in_specs=[vmem,           # sent (L, D)
                  vmem, vmem,     # h0, c0 (1, D)
                  vmem,           # fused prologue weight [W_ih.T | W1.T] (D, 5D)
                  vmem,           # fused LSTM bias (1, 4D)
                  vmem,           # fused recurrent weight [W_hh.T | W2.T] (D, 5D)
                  vmem,           # vt weight (1, 2D)
                  smem],          # vt bias (1,)
        out_specs=(smem, smem),
    )(sent, h0, c0, kparams["wpro"], kparams["ball"], kparams["wrec"],
      kparams["vtw"], kparams["vtb"])
    return parents, loss[0]


def reference_forward(sent_encodings, h0, c0, params):
    """Pure-JAX replica of the PyTorch forward (is_test=True, eval-mode dropout)."""
    L, D = sent_encodings.shape[1], sent_encodings.shape[2]
    sent = sent_encodings.reshape(L, D)
    W1, W2 = params["W1"], params["W2"]
    vt_w, vt_b = params["vt_w"], params["vt_b"]
    W_ih, W_hh = params["W_ih"], params["W_hh"]
    b = params["b_ih"] + params["b_hh"]

    e1 = sent @ W1.T
    h, c = h0[0], c0[0]
    parents = [0, 0]
    loss = jnp.zeros((), jnp.float32)
    for ind in range(2, L):
        x = sent[ind]
        gates = x @ W_ih.T + h @ W_hh.T + b
        i_g = jax.nn.sigmoid(gates[0:D])
        f_g = jax.nn.sigmoid(gates[D:2 * D])
        g_g = jnp.tanh(gates[2 * D:3 * D])
        o_g = jax.nn.sigmoid(gates[3 * D:4 * D])
        c = f_g * c + i_g * g_g
        h = o_g * jnp.tanh(c)

        e2 = h @ W2.T
        enc = jnp.concatenate([e1 * e2, e1 - e2], axis=1)
        attn = jnp.tanh(enc) @ vt_w[0] + vt_b[0]                    # (L,)
        mask = (jnp.arange(L) < ind).astype(jnp.float32)
        masked = attn + (-10000.0) * (1.0 - mask)
        parent = int(jnp.argmax(masked))
        logits = attn[:ind]
        loss = loss + (jax.nn.logsumexp(logits) - logits[parent])
        parents.append(parent)
    return jnp.array(parents, jnp.int32), loss / (L - 2 + 1e-05)


def make_params(key, hidden_dim):
    D = 2 * hidden_dim
    ks = jax.random.split(key, 8)

    def xavier(k, shape):
        bound = (6.0 / (shape[0] + shape[1])) ** 0.5
        return jax.random.uniform(k, shape, jnp.float32, -bound, bound)

    return dict(
        W1=xavier(ks[0], (D, D)),            # torch Linear weight (out, in)
        W2=xavier(ks[1], (D, D)),
        vt_w=xavier(ks[2], (1, 2 * D)),
        vt_b=jnp.zeros((1,), jnp.float32),
        W_ih=0.1 * jax.random.normal(ks[3], (4 * D, D), jnp.float32),
        W_hh=0.1 * jax.random.normal(ks[4], (4 * D, D), jnp.float32),
        b_ih=0.1 * jax.random.normal(ks[5], (4 * D,), jnp.float32),
        b_hh=0.1 * jax.random.normal(ks[6], (4 * D,), jnp.float32),
    )


if __name__ == "__main__":
    # config: hidden_dim=16 -> feature dim D = 32 (4D = 128 lanes); seq of 8; batch=1.
    hidden_dim = 16
    D = 2 * hidden_dim
    L = 8

    key = jax.random.PRNGKey(0)
    k_params, k_sent, k_h, k_c = jax.random.split(key, 4)

    params = make_params(k_params, hidden_dim)
    kparams = prepare_kernel_params(params)      # one-time weight prep, off the hot path
    kparams = jax.tree_util.tree_map(jax.block_until_ready, kparams)

    sent_encodings = jax.random.normal(k_sent, (1, L, D), jnp.float32)  # (batch=1, seq, 2H)
    h0 = jax.random.normal(k_h, (1, D), jnp.float32)                    # hidden_embedding[0]
    c0 = jax.random.normal(k_c, (1, D), jnp.float32)                    # hidden_embedding[1]

    # TODO(synk): dropout is treated as identity (eval mode); is_test=False
    # (Categorical sampling) path is not implemented — argmax (is_test=True) only.
    parents, loss = parent_tree_forward(sent_encodings, h0, c0, kparams)
    jax.block_until_ready((parents, loss))

    # sanity vs. pure-JAX reference of the PyTorch forward
    ref_parents, ref_loss = reference_forward(sent_encodings, h0, c0, params)

    assert parents.shape == (L,)
    assert int(parents[0]) == 0 and int(parents[1]) == 0
    assert bool(jnp.isfinite(loss))
    assert bool(jnp.array_equal(parents, ref_parents)), (parents, ref_parents)
    assert bool(jnp.allclose(loss, ref_loss, rtol=1e-3, atol=1e-3)), (loss, ref_loss)
    print("KERNEL_OK")
</pallas_src>

<mosaic_0001>
module attributes {stable_mosaic.version = 11 : i64} {
  func.func @parent_tree_kernel(%arg0: memref<8x32xf32, #tpu.memory_space<vmem>>, %arg1: memref<1x32xf32, #tpu.memory_space<vmem>>, %arg2: memref<1x32xf32, #tpu.memory_space<vmem>>, %arg3: memref<32x160xf32, #tpu.memory_space<vmem>>, %arg4: memref<1x128xf32, #tpu.memory_space<vmem>>, %arg5: memref<32x160xf32, #tpu.memory_space<vmem>>, %arg6: memref<1x64xf32, #tpu.memory_space<vmem>>, %arg7: memref<1xf32, #tpu.memory_space<smem>>, %arg8: memref<8xi32, #tpu.memory_space<smem>>, %arg9: memref<1xf32, #tpu.memory_space<smem>>) attributes {dimension_semantics = [], scalar_prefetch = 0 : i64, scratch_operands = 0 : i64, tpu.core_type = #tpu.core_type<tc>} {
    %c0 = arith.constant 0 : index
    %c0_0 = arith.constant 0 : index
    %0 = vector.load %arg0[%c0, %c0_0] : memref<8x32xf32, #tpu.memory_space<vmem>>, vector<8x32xf32>
    %c0_1 = arith.constant 0 : index
    %c0_2 = arith.constant 0 : index
    %1 = vector.load %arg3[%c0_1, %c0_2] : memref<32x160xf32, #tpu.memory_space<vmem>>, vector<32x160xf32>
    %cst = arith.constant dense<0.000000e+00> : vector<8x160xf32>
    %2 = tpu.matmul %0, %1, %cst {dimension_numbers = #tpu.dot_dimension_numbers<[1], [0], [0], [1], [0, 0, 1, 1], [], []>} : vector<8x32xf32>, vector<32x160xf32>, vector<8x160xf32> -> vector<8x160xf32>
    %3 = vector.extract_strided_slice %2 {offsets = [0, 0], sizes = [8, 128], strides = [1, 1]} : vector<8x160xf32> to vector<8x128xf32>
    %c0_3 = arith.constant 0 : index
    %c0_4 = arith.constant 0 : index
    %4 = vector.load %arg4[%c0_3, %c0_4] : memref<1x128xf32, #tpu.memory_space<vmem>>, vector<1x128xf32>
    %5 = vector.broadcast %4 : vector<1x128xf32> to vector<8x128xf32>
    %6 = arith.addf %3, %5 : vector<8x128xf32>
    %7 = vector.extract_strided_slice %2 {offsets = [0, 128], sizes = [8, 32], strides = [1, 1]} : vector<8x160xf32> to vector<8x32xf32>
    %c0_5 = arith.constant 0 : index
    %c0_6 = arith.constant 0 : index
    %8 = vector.load %arg5[%c0_5, %c0_6] : memref<32x160xf32, #tpu.memory_space<vmem>>, vector<32x160xf32>
    %c0_7 = arith.constant 0 : index
    %c0_8 = arith.constant 0 : index
    %9 = vector.load %arg6[%c0_7, %c0_8] : memref<1x64xf32, #tpu.memory_space<vmem>>, vector<1x64xf32>
    %c0_9 = arith.constant 0 : index
    %10 = memref.load %arg7[%c0_9] : memref<1xf32, #tpu.memory_space<smem>>
    %11 = tpu.iota {dimensions = array<i32: 0>} : vector<8x1xi32>
    %c0_i32 = arith.constant 0 : i32
    %c0_10 = arith.constant 0 : index
    %12 = memref.load %arg8[%c0_10] : memref<8xi32, #tpu.memory_space<smem>>
    memref.store %c0_i32, %arg8[%c0_10] : memref<8xi32, #tpu.memory_space<smem>>
    %c0_i32_11 = arith.constant 0 : i32
    %c1 = arith.constant 1 : index
    %13 = memref.load %arg8[%c1] : memref<8xi32, #tpu.memory_space<smem>>
    memref.store %c0_i32_11, %arg8[%c1] : memref<8xi32, #tpu.memory_space<smem>>
    %c0_12 = arith.constant 0 : index
    %c0_13 = arith.constant 0 : index
    %14 = vector.load %arg1[%c0_12, %c0_13] : memref<1x32xf32, #tpu.memory_space<vmem>>, vector<1x32xf32>
    %c0_14 = arith.constant 0 : index
    %c0_15 = arith.constant 0 : index
    %15 = vector.load %arg2[%c0_14, %c0_15] : memref<1x32xf32, #tpu.memory_space<vmem>>, vector<1x32xf32>
    %16 = vector.extract_strided_slice %6 {offsets = [2, 0], sizes = [1, 128], strides = [1, 1]} : vector<8x128xf32> to vector<1x128xf32>
    %cst_16 = arith.constant dense<0.000000e+00> : vector<1x160xf32>
    %17 = tpu.matmul %14, %8, %cst_16 {dimension_numbers = #tpu.dot_dimension_numbers<[1], [0], [0], [1], [0, 0, 1, 1], [], []>} : vector<1x32xf32>, vector<32x160xf32>, vector<1x160xf32> -> vector<1x160xf32>
    %18 = vector.extract_strided_slice %17 {offsets = [0, 0], sizes = [1, 128], strides = [1, 1]} : vector<1x160xf32> to vector<1x128xf32>
    %19 = arith.addf %16, %18 : vector<1x128xf32>
    %20 = vector.extract_strided_slice %19 {offsets = [0, 0], sizes = [1, 96], strides = [1, 1]} : vector<1x128xf32> to vector<1x96xf32>
    %21 = arith.negf %20 : vector<1x96xf32>
    %22 = math.exp %21 : vector<1x96xf32>
    %cst_17 = arith.constant 1.000000e+00 : f32
    %23 = vector.broadcast %cst_17 : f32 to vector<1x96xf32>
    %24 = arith.addf %23, %22 : vector<1x96xf32>
    %25 = arith.divf %23, %24 : vector<1x96xf32>
    %26 = vector.extract_strided_slice %25 {offsets = [0, 0], sizes = [1, 32], strides = [1, 1]} : vector<1x96xf32> to vector<1x32xf32>
    %27 = vector.extract_strided_slice %25 {offsets = [0, 32], sizes = [1, 32], strides = [1, 1]} : vector<1x96xf32> to vector<1x32xf32>
    %28 = vector.extract_strided_slice %25 {offsets = [0, 64], sizes = [1, 32], strides = [1, 1]} : vector<1x96xf32> to vector<1x32xf32>
    %29 = vector.extract_strided_slice %19 {offsets = [0, 96], sizes = [1, 32], strides = [1, 1]} : vector<1x128xf32> to vector<1x32xf32>
    %30 = math.tanh %29 : vector<1x32xf32>
    %31 = arith.mulf %27, %15 : vector<1x32xf32>
    %32 = arith.mulf %26, %30 : vector<1x32xf32>
    %33 = arith.addf %31, %32 : vector<1x32xf32>
    %34 = math.tanh %33 : vector<1x32xf32>
    %35 = arith.mulf %28, %34 : vector<1x32xf32>
    %cst_18 = arith.constant dense<0.000000e+00> : vector<1x160xf32>
    %36 = tpu.matmul %35, %8, %cst_18 {dimension_numbers = #tpu.dot_dimension_numbers<[1], [0], [0], [1], [0, 0, 1, 1], [], []>} : vector<1x32xf32>, vector<32x160xf32>, vector<1x160xf32> -> vector<1x160xf32>
    %37 = vector.extract_strided_slice %36 {offsets = [0, 128], sizes = [1, 32], strides = [1, 1]} : vector<1x160xf32> to vector<1x32xf32>
    %38 = vector.extract_strided_slice %6 {offsets = [3, 0], sizes = [1, 128], strides = [1, 1]} : vector<8x128xf32> to vector<1x128xf32>
    %39 = vector.extract_strided_slice %36 {offsets = [0, 0], sizes = [1, 128], strides = [1, 1]} : vector<1x160xf32> to vector<1x128xf32>
    %40 = arith.addf %38, %39 : vector<1x128xf32>
    %41 = vector.broadcast %37 : vector<1x32xf32> to vector<8x32xf32>
    %42 = arith.mulf %7, %41 : vector<8x32xf32>
    %43 = vector.broadcast %37 : vector<1x32xf32> to vector<8x32xf32>
    %44 = arith.subf %7, %43 : vector<8x32xf32>
    %45 = tpu.concatenate %42, %44 in 1 : vector<8x32xf32>, vector<8x32xf32> -> vector<8x64xf32>
    %46 = math.tanh %45 : vector<8x64xf32>
    %47 = vector.broadcast %9 : vector<1x64xf32> to vector<8x64xf32>
    %48 = arith.mulf %46, %47 : vector<8x64xf32>
    %cst_19 = arith.constant dense<0.000000e+00> : vector<8xf32>
    %49 = vector.multi_reduction <add>, %48, %cst_19 [1] : vector<8x64xf32> to vector<8xf32>
    %50 = vector.shape_cast %49 : vector<8xf32> to vector<8x1xf32>
    %51 = vector.broadcast %10 : f32 to vector<8x1xf32>
    %52 = arith.addf %50, %51 : vector<8x1xf32>
    %c2_i32 = arith.constant 2 : i32
    %53 = vector.broadcast %c2_i32 : i32 to vector<8x1xi32>
    %54 = arith.cmpi slt, %11, %53 : vector<8x1xi32>
    %cst_20 = arith.constant 1.000000e+04 : f32
    %55 = vector.broadcast %cst_20 : f32 to vector<8x1xf32>
    %56 = arith.subf %52, %55 : vector<8x1xf32>
    %57 = arith.select %54, %52, %56 : vector<8x1xi1>, vector<8x1xf32>
    %58 = vector.shape_cast %57 : vector<8x1xf32> to vector<1x8x1xf32>
    %cst_21 = arith.constant dense<0xFF800000> : vector<1xf32>
    %59 = vector.multi_reduction <maximumf>, %58, %cst_21 [1, 2] : vector<1x8x1xf32> to vector<1xf32>
    %60 = vector.shape_cast %59 : vector<1xf32> to vector<1x1x1xf32>
    %61 = vector.extract %60[0, 0, 0] : f32 from vector<1x1x1xf32>
    %62 = vector.broadcast %61 : f32 to vector<8x1xf32>
    %63 = arith.cmpf oeq, %57, %62 : vector<8x1xf32>
    %c8_i32 = arith.constant 8 : i32
    %64 = vector.broadcast %c8_i32 : i32 to vector<8x1xi32>
    %65 = arith.select %63, %11, %64 : vector<8x1xi1>, vector<8x1xi32>
    %66 = vector.shape_cast %65 : vector<8x1xi32> to vector<1x8x1xi32>
    %cst_22 = arith.constant dense<2147483647> : vector<1xi32>
    %67 = vector.multi_reduction <minsi>, %66, %cst_22 [1, 2] : vector<1x8x1xi32> to vector<1xi32>
    %68 = vector.shape_cast %67 : vector<1xi32> to vector<1x1x1xi32>
    %69 = vector.extract %68[0, 0, 0] : i32 from vector<1x1x1xi32>
    %70 = vector.broadcast %61 : f32 to vector<8x1xf32>
    %71 = arith.subf %52, %70 : vector<8x1xf32>
    %cst_23 = arith.constant -1.000000e+30 : f32
    %72 = vector.broadcast %cst_23 : f32 to vector<8x1xf32>
    %73 = arith.select %54, %71, %72 : vector<8x1xi1>, vector<8x1xf32>
    %74 = math.exp %73 : vector<8x1xf32>
    %75 = vector.shape_cast %74 : vector<8x1xf32> to vector<1x8x1xf32>
    %cst_24 = arith.constant dense<0.000000e+00> : vector<1xf32>
    %76 = vector.multi_reduction <add>, %75, %cst_24 [1, 2] : vector<1x8x1xf32> to vector<1xf32>
    %77 = vector.shape_cast %76 : vector<1xf32> to vector<1x1x1xf32>
    %78 = vector.extract %77[0, 0, 0] : f32 from vector<1x1x1xf32>
    %79 = math.log %78 : f32
    %cst_25 = arith.constant 0.000000e+00 : f32
    %80 = arith.addf %cst_25, %79 : f32
    %c2 = arith.constant 2 : index
    %81 = memref.load %arg8[%c2] : memref<8xi32, #tpu.memory_space<smem>>
    memref.store %69, %arg8[%c2] : memref<8xi32, #tpu.memory_space<smem>>
    %82 = vector.extract_strided_slice %40 {offsets = [0, 0], sizes = [1, 96], strides = [1, 1]} : vector<1x128xf32> to vector<1x96xf32>
    %83 = arith.negf %82 : vector<1x96xf32>
    %84 = math.exp %83 : vector<1x96xf32>
    %cst_26 = arith.constant 1.000000e+00 : f32
    %85 = vector.broadcast %cst_26 : f32 to vector<1x96xf32>
    %86 = arith.addf %85, %84 : vector<1x96xf32>
    %87 = arith.divf %85, %86 : vector<1x96xf32>
    %88 = vector.extract_strided_slice %87 {offsets = [0, 0], sizes = [1, 32], strides = [1, 1]} : vector<1x96xf32> to vector<1x32xf32>
    %89 = vector.extract_strided_slice %87 {offsets = [0, 32], sizes = [1, 32], strides = [1, 1]} : vector<1x96xf32> to vector<1x32xf32>
    %90 = vector.extract_strided_slice %87 {offsets = [0, 64], sizes = [1, 32], strides = [1, 1]} : vector<1x96xf32> to vector<1x32xf32>
    %91 = vector.extract_strided_slice %40 {offsets = [0, 96], sizes = [1, 32], strides = [1, 1]} : vector<1x128xf32> to vector<1x32xf32>
    %92 = math.tanh %91 : vector<1x32xf32>
    %93 = arith.mulf %89, %33 : vector<1x32xf32>
    %94 = arith.mulf %88, %92 : vector<1x32xf32>
    %95 = arith.addf %93, %94 : vector<1x32xf32>
    %96 = math.tanh %95 : vector<1x32xf32>
    %97 = arith.mulf %90, %96 : vector<1x32xf32>
    %cst_27 = arith.constant dense<0.000000e+00> : vector<1x160xf32>
    %98 = tpu.matmul %97, %8, %cst_27 {dimension_numbers = #tpu.dot_dimension_numbers<[1], [0], [0], [1], [0, 0, 1, 1], [], []>} : vector<1x32xf32>, vector<32x160xf32>, vector<1x160xf32> -> vector<1x160xf32>
    %99 = vector.extract_strided_slice %98 {offsets = [0, 128], sizes = [1, 32], strides = [1, 1]} : vector<1x160xf32> to vector<1x32xf32>
    %100 = vector.extract_strided_slice %6 {offsets = [4, 0], sizes = [1, 128], strides = [1, 1]} : vector<8x128xf32> to vector<1x128xf32>
    %101 = vector.extract_strided_slice %98 {offsets = [0, 0], sizes = [1, 128], strides = [1, 1]} : vector<1x160xf32> to vector<1x128xf32>
    %102 = arith.addf %100, %101 : vector<1x128xf32>
    %103 = vector.broadcast %99 : vector<1x32xf32> to vector<8x32xf32>
    %104 = arith.mulf %7, %103 : vector<8x32xf32>
    %105 = vector.broadcast %99 : vector<1x32xf32> to vector<8x32xf32>
    %106 = arith.subf %7, %105 : vector<8x32xf32>
    %107 = tpu.concatenate %104, %106 in 1 : vector<8x32xf32>, vector<8x32xf32> -> vector<8x64xf32>
    %108 = math.tanh %107 : vector<8x64xf32>
    %109 = vector.broadcast %9 : vector<1x64xf32> to vector<8x64xf32>
    %110 = arith.mulf %108, %109 : vector<8x64xf32>
    %cst_28 = arith.constant dense<0.000000e+00> : vector<8xf32>
    %111 = vector.multi_reduction <add>, %110, %cst_28 [1] : vector<8x64xf32> to vector<8xf32>
    %112 = vector.shape_cast %111 : vector<8xf32> to vector<8x1xf32>
    %113 = vector.broadcast %10 : f32 to vector<8x1xf32>
    %114 = arith.addf %112, %113 : vector<8x1xf32>
    %c3_i32 = arith.constant 3 : i32
    %115 = vector.broadcast %c3_i32 : i32 to vector<8x1xi32>
    %116 = arith.cmpi slt, %11, %115 : vector<8x1xi32>
    %cst_29 = arith.constant 1.000000e+04 : f32
    %117 = vector.broadcast %cst_29 : f32 to vector<8x1xf32>
    %118 = arith.subf %114, %117 : vector<8x1xf32>
    %119 = arith.select %116, %114, %118 : vector<8x1xi1>, vector<8x1xf32>
    %120 = vector.shape_cast %119 : vector<8x1xf32> to vector<1x8x1xf32>
    %cst_30 = arith.constant dense<0xFF800000> : vector<1xf32>
    %121 = vector.multi_reduction <maximumf>, %120, %cst_30 [1, 2] : vector<1x8x1xf32> to vector<1xf32>
    %122 = vector.shape_cast %121 : vector<1xf32> to vector<1x1x1xf32>
    %123 = vector.extract %122[0, 0, 0] : f32 from vector<1x1x1xf32>
    %124 = vector.broadcast %123 : f32 to vector<8x1xf32>
    %125 = arith.cmpf oeq, %119, %124 : vector<8x1xf32>
    %c8_i32_31 = arith.constant 8 : i32
    %126 = vector.broadcast %c8_i32_31 : i32 to vector<8x1xi32>
    %127 = arith.select %125, %11, %126 : vector<8x1xi1>, vector<8x1xi32>
    %128 = vector.shape_cast %127 : vector<8x1xi32> to vector<1x8x1xi32>
    %cst_32 = arith.constant dense<2147483647> : vector<1xi32>
    %129 = vector.multi_reduction <minsi>, %128, %cst_32 [1, 2] : vector<1x8x1xi32> to vector<1xi32>
    %130 = vector.shape_cast %129 : vector<1xi32> to vector<1x1x1xi32>
    %131 = vector.extract %130[0, 0, 0] : i32 from vector<1x1x1xi32>
    %132 = vector.broadcast %123 : f32 to vector<8x1xf32>
    %133 = arith.subf %114, %132 : vector<8x1xf32>
    %cst_33 = arith.constant -1.000000e+30 : f32
    %134 = vector.broadcast %cst_33 : f32 to vector<8x1xf32>
    %135 = arith.select %116, %133, %134 : vector<8x1xi1>, vector<8x1xf32>
    %136 = math.exp %135 : vector<8x1xf32>
    %137 = vector.shape_cast %136 : vector<8x1xf32> to vector<1x8x1xf32>
    %cst_34 = arith.constant dense<0.000000e+00> : vector<1xf32>
    %138 = vector.multi_reduction <add>, %137, %cst_34 [1, 2] : vector<1x8x1xf32> to vector<1xf32>
    %139 = vector.shape_cast %138 : vector<1xf32> to vector<1x1x1xf32>
    %140 = vector.extract %139[0, 0, 0] : f32 from vector<1x1x1xf32>
    %141 = math.log %140 : f32
    %142 = arith.addf %80, %141 : f32
    %c3 = arith.constant 3 : index
    %143 = memref.load %arg8[%c3] : memref<8xi32, #tpu.memory_space<smem>>
    memref.store %131, %arg8[%c3] : memref<8xi32, #tpu.memory_space<smem>>
    %144 = vector.extract_strided_slice %102 {offsets = [0, 0], sizes = [1, 96], strides = [1, 1]} : vector<1x128xf32> to vector<1x96xf32>
    %145 = arith.negf %144 : vector<1x96xf32>
    %146 = math.exp %145 : vector<1x96xf32>
    %cst_35 = arith.constant 1.000000e+00 : f32
    %147 = vector.broadcast %cst_35 : f32 to vector<1x96xf32>
    %148 = arith.addf %147, %146 : vector<1x96xf32>
    %149 = arith.divf %147, %148 : vector<1x96xf32>
    %150 = vector.extract_strided_slice %149 {offsets = [0, 0], sizes = [1, 32], strides = [1, 1]} : vector<1x96xf32> to vector<1x32xf32>
    %151 = vector.extract_strided_slice %149 {offsets = [0, 32], sizes = [1, 32], strides = [1, 1]} : vector<1x96xf32> to vector<1x32xf32>
    %152 = vector.extract_strided_slice %149 {offsets = [0, 64], sizes = [1, 32], strides = [1, 1]} : vector<1x96xf32> to vector<1x32xf32>
    %153 = vector.extract_strided_slice %102 {offsets = [0, 96], sizes = [1, 32], strides = [1, 1]} : vector<1x128xf32> to vector<1x32xf32>
    %154 = math.tanh %153 : vector<1x32xf32>
    %155 = arith.mulf %151, %95 : vector<1x32xf32>
    %156 = arith.mulf %150, %154 : vector<1x32xf32>
    %157 = arith.addf %155, %156 : vector<1x32xf32>
    %158 = math.tanh %157 : vector<1x32xf32>
    %159 = arith.mulf %152, %158 : vector<1x32xf32>
    %cst_36 = arith.constant dense<0.000000e+00> : vector<1x160xf32>
    %160 = tpu.matmul %159, %8, %cst_36 {dimension_numbers = #tpu.dot_dimension_numbers<[1], [0], [0], [1], [0, 0, 1, 1], [], []>} : vector<1x32xf32>, vector<32x160xf32>, vector<1x160xf32> -> vector<1x160xf32>
    %161 = vector.extract_strided_slice %160 {offsets = [0, 128], sizes = [1, 32], strides = [1, 1]} : vector<1x160xf32> to vector<1x32xf32>
    %162 = vector.extract_strided_slice %6 {offsets = [5, 0], sizes = [1, 128], strides = [1, 1]} : vector<8x128xf32> to vector<1x128xf32>
    %163 = vector.extract_strided_slice %160 {offsets = [0, 0], sizes = [1, 128], strides = [1, 1]} : vector<1x160xf32> to vector<1x128xf32>
    %164 = arith.addf %162, %163 : vector<1x128xf32>
    %165 = vector.broadcast %161 : vector<1x32xf32> to vector<8x32xf32>
    %166 = arith.mulf %7, %165 : vector<8x32xf32>
    %167 = vector.broadcast %161 : vector<1x32xf32> to vector<8x32xf32>
    %168 = arith.subf %7, %167 : vector<8x32xf32>
    %169 = tpu.concatenate %166, %168 in 1 : vector<8x32xf32>, vector<8x32xf32> -> vector<8x64xf32>
    %170 = math.tanh %169 : vector<8x64xf32>
    %171 = vector.broadcast %9 : vector<1x64xf32> to vector<8x64xf32>
    %172 = arith.mulf %170, %171 : vector<8x64xf32>
    %cst_37 = arith.constant dense<0.000000e+00> : vector<8xf32>
    %173 = vector.multi_reduction <add>, %172, %cst_37 [1] : vector<8x64xf32> to vector<8xf32>
    %174 = vector.shape_cast %173 : vector<8xf32> to vector<8x1xf32>
    %175 = vector.broadcast %10 : f32 to vector<8x1xf32>
    %176 = arith.addf %174, %175 : vector<8x1xf32>
    %c4_i32 = arith.constant 4 : i32
    %177 = vector.broadcast %c4_i32 : i32 to vector<8x1xi32>
    %178 = arith.cmpi slt, %11, %177 : vector<8x1xi32>
    %cst_38 = arith.constant 1.000000e+04 : f32
    %179 = vector.broadcast %cst_38 : f32 to vector<8x1xf32>
    %180 = arith.subf %176, %179 : vector<8x1xf32>
    %181 = arith.select %178, %176, %180 : vector<8x1xi1>, vector<8x1xf32>
    %182 = vector.shape_cast %181 : vector<8x1xf32> to vector<1x8x1xf32>
    %cst_39 = arith.constant dense<0xFF800000> : vector<1xf32>
    %183 = vector.multi_reduction <maximumf>, %182, %cst_39 [1, 2] : vector<1x8x1xf32> to vector<1xf32>
    %184 = vector.shape_cast %183 : vector<1xf32> to vector<1x1x1xf32>
    %185 = vector.extract %184[0, 0, 0] : f32 from vector<1x1x1xf32>
    %186 = vector.broadcast %185 : f32 to vector<8x1xf32>
    %187 = arith.cmpf oeq, %181, %186 : vector<8x1xf32>
    %c8_i32_40 = arith.constant 8 : i32
    %188 = vector.broadcast %c8_i32_40 : i32 to vector<8x1xi32>
    %189 = arith.select %187, %11, %188 : vector<8x1xi1>, vector<8x1xi32>
    %190 = vector.shape_cast %189 : vector<8x1xi32> to vector<1x8x1xi32>
    %cst_41 = arith.constant dense<2147483647> : vector<1xi32>
    %191 = vector.multi_reduction <minsi>, %190, %cst_41 [1, 2] : vector<1x8x1xi32> to vector<1xi32>
    %192 = vector.shape_cast %191 : vector<1xi32> to vector<1x1x1xi32>
    %193 = vector.extract %192[0, 0, 0] : i32 from vector<1x1x1xi32>
    %194 = vector.broadcast %185 : f32 to vector<8x1xf32>
    %195 = arith.subf %176, %194 : vector<8x1xf32>
    %cst_42 = arith.constant -1.000000e+30 : f32
    %196 = vector.broadcast %cst_42 : f32 to vector<8x1xf32>
    %197 = arith.select %178, %195, %196 : vector<8x1xi1>, vector<8x1xf32>
    %198 = math.exp %197 : vector<8x1xf32>
    %199 = vector.shape_cast %198 : vector<8x1xf32> to vector<1x8x1xf32>
    %cst_43 = arith.constant dense<0.000000e+00> : vector<1xf32>
    %200 = vector.multi_reduction <add>, %199, %cst_43 [1, 2] : vector<1x8x1xf32> to vector<1xf32>
    %201 = vector.shape_cast %200 : vector<1xf32> to vector<1x1x1xf32>
    %202 = vector.extract %201[0, 0, 0] : f32 from vector<1x1x1xf32>
    %203 = math.log %202 : f32
    %204 = arith.addf %142, %203 : f32
    %c4 = arith.constant 4 : index
    %205 = memref.load %arg8[%c4] : memref<8xi32, #tpu.memory_space<smem>>
    memref.store %193, %arg8[%c4] : memref<8xi32, #tpu.memory_space<smem>>
    %206 = vector.extract_strided_slice %164 {offsets = [0, 0], sizes = [1, 96], strides = [1, 1]} : vector<1x128xf32> to vector<1x96xf32>
    %207 = arith.negf %206 : vector<1x96xf32>
    %208 = math.exp %207 : vector<1x96xf32>
    %cst_44 = arith.constant 1.000000e+00 : f32
    %209 = vector.broadcast %cst_44 : f32 to vector<1x96xf32>
    %210 = arith.addf %209, %208 : vector<1x96xf32>
    %211 = arith.divf %209, %210 : vector<1x96xf32>
    %212 = vector.extract_strided_slice %211 {offsets = [0, 0], sizes = [1, 32], strides = [1, 1]} : vector<1x96xf32> to vector<1x32xf32>
    %213 = vector.extract_strided_slice %211 {offsets = [0, 32], sizes = [1, 32], strides = [1, 1]} : vector<1x96xf32> to vector<1x32xf32>
    %214 = vector.extract_strided_slice %211 {offsets = [0, 64], sizes = [1, 32], strides = [1, 1]} : vector<1x96xf32> to vector<1x32xf32>
    %215 = vector.extract_strided_slice %164 {offsets = [0, 96], sizes = [1, 32], strides = [1, 1]} : vector<1x128xf32> to vector<1x32xf32>
    %216 = math.tanh %215 : vector<1x32xf32>
    %217 = arith.mulf %213, %157 : vector<1x32xf32>
    %218 = arith.mulf %212, %216 : vector<1x32xf32>
    %219 = arith.addf %217, %218 : vector<1x32xf32>
    %220 = math.tanh %219 : vector<1x32xf32>
    %221 = arith.mulf %214, %220 : vector<1x32xf32>
    %cst_45 = arith.constant dense<0.000000e+00> : vector<1x160xf32>
    %222 = tpu.matmul %221, %8, %cst_45 {dimension_numbers = #tpu.dot_dimension_numbers<[1], [0], [0], [1], [0, 0, 1, 1], [], []>} : vector<1x32xf32>, vector<32x160xf32>, vector<1x160xf32> -> vector<1x160xf32>
    %223 = vector.extract_strided_slice %222 {offsets = [0, 128], sizes = [1, 32], strides = [1, 1]} : vector<1x160xf32> to vector<1x32xf32>
    %224 = vector.extract_strided_slice %6 {offsets = [6, 0], sizes = [1, 128], strides = [1, 1]} : vector<8x128xf32> to vector<1x128xf32>
    %225 = vector.extract_strided_slice %222 {offsets = [0, 0], sizes = [1, 128], strides = [1, 1]} : vector<1x160xf32> to vector<1x128xf32>
    %226 = arith.addf %224, %225 : vector<1x128xf32>
    %227 = vector.broadcast %223 : vector<1x32xf32> to vector<8x32xf32>
    %228 = arith.mulf %7, %227 : vector<8x32xf32>
    %229 = vector.broadcast %223 : vector<1x32xf32> to vector<8x32xf32>
    %230 = arith.subf %7, %229 : vector<8x32xf32>
    %231 = tpu.concatenate %228, %230 in 1 : vector<8x32xf32>, vector<8x32xf32> -> vector<8x64xf32>
    %232 = math.tanh %231 : vector<8x64xf32>
    %233 = vector.broadcast %9 : vector<1x64xf32> to vector<8x64xf32>
    %234 = arith.mulf %232, %233 : vector<8x64xf32>
    %cst_46 = arith.constant dense<0.000000e+00> : vector<8xf32>
    %235 = vector.multi_reduction <add>, %234, %cst_46 [1] : vector<8x64xf32> to vector<8xf32>
    %236 = vector.shape_cast %235 : vector<8xf32> to vector<8x1xf32>
    %237 = vector.broadcast %10 : f32 to vector<8x1xf32>
    %238 = arith.addf %236, %237 : vector<8x1xf32>
    %c5_i32 = arith.constant 5 : i32
    %239 = vector.broadcast %c5_i32 : i32 to vector<8x1xi32>
    %240 = arith.cmpi slt, %11, %239 : vector<8x1xi32>
    %cst_47 = arith.constant 1.000000e+04 : f32
    %241 = vector.broadcast %cst_47 : f32 to vector<8x1xf32>
    %242 = arith.subf %238, %241 : vector<8x1xf32>
    %243 = arith.select %240, %238, %242 : vector<8x1xi1>, vector<8x1xf32>
    %244 = vector.shape_cast %243 : vector<8x1xf32> to vector<1x8x1xf32>
    %cst_48 = arith.constant dense<0xFF800000> : vector<1xf32>
    %245 = vector.multi_reduction <maximumf>, %244, %cst_48 [1, 2] : vector<1x8x1xf32> to vector<1xf32>
    %246 = vector.shape_cast %245 : vector<1xf32> to vector<1x1x1xf32>
    %247 = vector.extract %246[0, 0, 0] : f32 from vector<1x1x1xf32>
    %248 = vector.broadcast %247 : f32 to vector<8x1xf32>
    %249 = arith.cmpf oeq, %243, %248 : vector<8x1xf32>
    %c8_i32_49 = arith.constant 8 : i32
    %250 = vector.broadcast %c8_i32_49 : i32 to vector<8x1xi32>
    %251 = arith.select %249, %11, %250 : vector<8x1xi1>, vector<8x1xi32>
    %252 = vector.shape_cast %251 : vector<8x1xi32> to vector<1x8x1xi32>
    %cst_50 = arith.constant dense<2147483647> : vector<1xi32>
    %253 = vector.multi_reduction <minsi>, %252, %cst_50 [1, 2] : vector<1x8x1xi32> to vector<1xi32>
    %254 = vector.shape_cast %253 : vector<1xi32> to vector<1x1x1xi32>
    %255 = vector.extract %254[0, 0, 0] : i32 from vector<1x1x1xi32>
    %256 = vector.broadcast %247 : f32 to vector<8x1xf32>
    %257 = arith.subf %238, %256 : vector<8x1xf32>
    %cst_51 = arith.constant -1.000000e+30 : f32
    %258 = vector.broadcast %cst_51 : f32 to vector<8x1xf32>
    %259 = arith.select %240, %257, %258 : vector<8x1xi1>, vector<8x1xf32>
    %260 = math.exp %259 : vector<8x1xf32>
    %261 = vector.shape_cast %260 : vector<8x1xf32> to vector<1x8x1xf32>
    %cst_52 = arith.constant dense<0.000000e+00> : vector<1xf32>
    %262 = vector.multi_reduction <add>, %261, %cst_52 [1, 2] : vector<1x8x1xf32> to vector<1xf32>
    %263 = vector.shape_cast %262 : vector<1xf32> to vector<1x1x1xf32>
    %264 = vector.extract %263[0, 0, 0] : f32 from vector<1x1x1xf32>
    %265 = math.log %264 : f32
    %266 = arith.addf %204, %265 : f32
    %c5 = arith.constant 5 : index
    %267 = memref.load %arg8[%c5] : memref<8xi32, #tpu.memory_space<smem>>
    memref.store %255, %arg8[%c5] : memref<8xi32, #tpu.memory_space<smem>>
    %268 = vector.extract_strided_slice %226 {offsets = [0, 0], sizes = [1, 96], strides = [1, 1]} : vector<1x128xf32> to vector<1x96xf32>
    %269 = arith.negf %268 : vector<1x96xf32>
    %270 = math.exp %269 : vector<1x96xf32>
    %cst_53 = arith.constant 1.000000e+00 : f32
    %271 = vector.broadcast %cst_53 : f32 to vector<1x96xf32>
    %272 = arith.addf %271, %270 : vector<1x96xf32>
    %273 = arith.divf %271, %272 : vector<1x96xf32>
    %274 = vector.extract_strided_slice %273 {offsets = [0, 0], sizes = [1, 32], strides = [1, 1]} : vector<1x96xf32> to vector<1x32xf32>
    %275 = vector.extract_strided_slice %273 {offsets = [0, 32], sizes = [1, 32], strides = [1, 1]} : vector<1x96xf32> to vector<1x32xf32>
    %276 = vector.extract_strided_slice %273 {offsets = [0, 64], sizes = [1, 32], strides = [1, 1]} : vector<1x96xf32> to vector<1x32xf32>
    %277 = vector.extract_strided_slice %226 {offsets = [0, 96], sizes = [1, 32], strides = [1, 1]} : vector<1x128xf32> to vector<1x32xf32>
    %278 = math.tanh %277 : vector<1x32xf32>
    %279 = arith.mulf %275, %219 : vector<1x32xf32>
    %280 = arith.mulf %274, %278 : vector<1x32xf32>
    %281 = arith.addf %279, %280 : vector<1x32xf32>
    %282 = math.tanh %281 : vector<1x32xf32>
    %283 = arith.mulf %276, %282 : vector<1x32xf32>
    %cst_54 = arith.constant dense<0.000000e+00> : vector<1x160xf32>
    %284 = tpu.matmul %283, %8, %cst_54 {dimension_numbers = #tpu.dot_dimension_numbers<[1], [0], [0], [1], [0, 0, 1, 1], [], []>} : vector<1x32xf32>, vector<32x160xf32>, vector<1x160xf32> -> vector<1x160xf32>
    %285 = vector.extract_strided_slice %284 {offsets = [0, 128], sizes = [1, 32], strides = [1, 1]} : vector<1x160xf32> to vector<1x32xf32>
    %286 = vector.extract_strided_slice %6 {offsets = [7, 0], sizes = [1, 128], strides = [1, 1]} : vector<8x128xf32> to vector<1x128xf32>
    %287 = vector.extract_strided_slice %284 {offsets = [0, 0], sizes = [1, 128], strides = [1, 1]} : vector<1x160xf32> to vector<1x128xf32>
    %288 = arith.addf %286, %287 : vector<1x128xf32>
    %289 = vector.broadcast %285 : vector<1x32xf32> to vector<8x32xf32>
    %290 = arith.mulf %7, %289 : vector<8x32xf32>
    %291 = vector.broadcast %285 : vector<1x32xf32> to vector<8x32xf32>
    %292 = arith.subf %7, %291 : vector<8x32xf32>
    %293 = tpu.concatenate %290, %292 in 1 : vector<8x32xf32>, vector<8x32xf32> -> vector<8x64xf32>
    %294 = math.tanh %293 : vector<8x64xf32>
    %295 = vector.broadcast %9 : vector<1x64xf32> to vector<8x64xf32>
    %296 = arith.mulf %294, %295 : vector<8x64xf32>
    %cst_55 = arith.constant dense<0.000000e+00> : vector<8xf32>
    %297 = vector.multi_reduction <add>, %296, %cst_55 [1] : vector<8x64xf32> to vector<8xf32>
    %298 = vector.shape_cast %297 : vector<8xf32> to vector<8x1xf32>
    %299 = vector.broadcast %10 : f32 to vector<8x1xf32>
    %300 = arith.addf %298, %299 : vector<8x1xf32>
    %c6_i32 = arith.constant 6 : i32
    %301 = vector.broadcast %c6_i32 : i32 to vector<8x1xi32>
    %302 = arith.cmpi slt, %11, %301 : vector<8x1xi32>
    %cst_56 = arith.constant 1.000000e+04 : f32
    %303 = vector.broadcast %cst_56 : f32 to vector<8x1xf32>
    %304 = arith.subf %300, %303 : vector<8x1xf32>
    %305 = arith.select %302, %300, %304 : vector<8x1xi1>, vector<8x1xf32>
    %306 = vector.shape_cast %305 : vector<8x1xf32> to vector<1x8x1xf32>
    %cst_57 = arith.constant dense<0xFF800000> : vector<1xf32>
    %307 = vector.multi_reduction <maximumf>, %306, %cst_57 [1, 2] : vector<1x8x1xf32> to vector<1xf32>
    %308 = vector.shape_cast %307 : vector<1xf32> to vector<1x1x1xf32>
    %309 = vector.extract %308[0, 0, 0] : f32 from vector<1x1x1xf32>
    %310 = vector.broadcast %309 : f32 to vector<8x1xf32>
    %311 = arith.cmpf oeq, %305, %310 : vector<8x1xf32>
    %c8_i32_58 = arith.constant 8 : i32
    %312 = vector.broadcast %c8_i32_58 : i32 to vector<8x1xi32>
    %313 = arith.select %311, %11, %312 : vector<8x1xi1>, vector<8x1xi32>
    %314 = vector.shape_cast %313 : vector<8x1xi32> to vector<1x8x1xi32>
    %cst_59 = arith.constant dense<2147483647> : vector<1xi32>
    %315 = vector.multi_reduction <minsi>, %314, %cst_59 [1, 2] : vector<1x8x1xi32> to vector<1xi32>
    %316 = vector.shape_cast %315 : vector<1xi32> to vector<1x1x1xi32>
    %317 = vector.extract %316[0, 0, 0] : i32 from vector<1x1x1xi32>
    %318 = vector.broadcast %309 : f32 to vector<8x1xf32>
    %319 = arith.subf %300, %318 : vector<8x1xf32>
    %cst_60 = arith.constant -1.000000e+30 : f32
    %320 = vector.broadcast %cst_60 : f32 to vector<8x1xf32>
    %321 = arith.select %302, %319, %320 : vector<8x1xi1>, vector<8x1xf32>
    %322 = math.exp %321 : vector<8x1xf32>
    %323 = vector.shape_cast %322 : vector<8x1xf32> to vector<1x8x1xf32>
    %cst_61 = arith.constant dense<0.000000e+00> : vector<1xf32>
    %324 = vector.multi_reduction <add>, %323, %cst_61 [1, 2] : vector<1x8x1xf32> to vector<1xf32>
    %325 = vector.shape_cast %324 : vector<1xf32> to vector<1x1x1xf32>
    %326 = vector.extract %325[0, 0, 0] : f32 from vector<1x1x1xf32>
    %327 = math.log %326 : f32
    %328 = arith.addf %266, %327 : f32
    %c6 = arith.constant 6 : index
    %329 = memref.load %arg8[%c6] : memref<8xi32, #tpu.memory_space<smem>>
    memref.store %317, %arg8[%c6] : memref<8xi32, #tpu.memory_space<smem>>
    %330 = vector.extract_strided_slice %288 {offsets = [0, 0], sizes = [1, 96], strides = [1, 1]} : vector<1x128xf32> to vector<1x96xf32>
    %331 = arith.negf %330 : vector<1x96xf32>
    %332 = math.exp %331 : vector<1x96xf32>
    %cst_62 = arith.constant 1.000000e+00 : f32
    %333 = vector.broadcast %cst_62 : f32 to vector<1x96xf32>
    %334 = arith.addf %333, %332 : vector<1x96xf32>
    %335 = arith.divf %333, %334 : vector<1x96xf32>
    %336 = vector.extract_strided_slice %335 {offsets = [0, 0], sizes = [1, 32], strides = [1, 1]} : vector<1x96xf32> to vector<1x32xf32>
    %337 = vector.extract_strided_slice %335 {offsets = [0, 32], sizes = [1, 32], strides = [1, 1]} : vector<1x96xf32> to vector<1x32xf32>
    %338 = vector.extract_strided_slice %335 {offsets = [0, 64], sizes = [1, 32], strides = [1, 1]} : vector<1x96xf32> to vector<1x32xf32>
    %339 = vector.extract_strided_slice %288 {offsets = [0, 96], sizes = [1, 32], strides = [1, 1]} : vector<1x128xf32> to vector<1x32xf32>
    %340 = math.tanh %339 : vector<1x32xf32>
    %341 = arith.mulf %337, %281 : vector<1x32xf32>
    %342 = arith.mulf %336, %340 : vector<1x32xf32>
    %343 = arith.addf %341, %342 : vector<1x32xf32>
    %344 = math.tanh %343 : vector<1x32xf32>
    %345 = arith.mulf %338, %344 : vector<1x32xf32>
    %cst_63 = arith.constant dense<0.000000e+00> : vector<1x160xf32>
    %346 = tpu.matmul %345, %8, %cst_63 {dimension_numbers = #tpu.dot_dimension_numbers<[1], [0], [0], [1], [0, 0, 1, 1], [], []>} : vector<1x32xf32>, vector<32x160xf32>, vector<1x160xf32> -> vector<1x160xf32>
    %347 = vector.extract_strided_slice %346 {offsets = [0, 128], sizes = [1, 32], strides = [1, 1]} : vector<1x160xf32> to vector<1x32xf32>
    %348 = vector.broadcast %347 : vector<1x32xf32> to vector<8x32xf32>
    %349 = arith.mulf %7, %348 : vector<8x32xf32>
    %350 = vector.broadcast %347 : vector<1x32xf32> to vector<8x32xf32>
    %351 = arith.subf %7, %350 : vector<8x32xf32>
    %352 = tpu.concatenate %349, %351 in 1 : vector<8x32xf32>, vector<8x32xf32> -> vector<8x64xf32>
    %353 = math.tanh %352 : vector<8x64xf32>
    %354 = vector.broadcast %9 : vector<1x64xf32> to vector<8x64xf32>
    %355 = arith.mulf %353, %354 : vector<8x64xf32>
    %cst_64 = arith.constant dense<0.000000e+00> : vector<8xf32>
    %356 = vector.multi_reduction <add>, %355, %cst_64 [1] : vector<8x64xf32> to vector<8xf32>
    %357 = vector.shape_cast %356 : vector<8xf32> to vector<8x1xf32>
    %358 = vector.broadcast %10 : f32 to vector<8x1xf32>
    %359 = arith.addf %357, %358 : vector<8x1xf32>
    %c7_i32 = arith.constant 7 : i32
    %360 = vector.broadcast %c7_i32 : i32 to vector<8x1xi32>
    %361 = arith.cmpi slt, %11, %360 : vector<8x1xi32>
    %cst_65 = arith.constant 1.000000e+04 : f32
    %362 = vector.broadcast %cst_65 : f32 to vector<8x1xf32>
    %363 = arith.subf %359, %362 : vector<8x1xf32>
    %364 = arith.select %361, %359, %363 : vector<8x1xi1>, vector<8x1xf32>
    %365 = vector.shape_cast %364 : vector<8x1xf32> to vector<1x8x1xf32>
    %cst_66 = arith.constant dense<0xFF800000> : vector<1xf32>
    %366 = vector.multi_reduction <maximumf>, %365, %cst_66 [1, 2] : vector<1x8x1xf32> to vector<1xf32>
    %367 = vector.shape_cast %366 : vector<1xf32> to vector<1x1x1xf32>
    %368 = vector.extract %367[0, 0, 0] : f32 from vector<1x1x1xf32>
    %369 = vector.broadcast %368 : f32 to vector<8x1xf32>
    %370 = arith.cmpf oeq, %364, %369 : vector<8x1xf32>
    %c8_i32_67 = arith.constant 8 : i32
    %371 = vector.broadcast %c8_i32_67 : i32 to vector<8x1xi32>
    %372 = arith.select %370, %11, %371 : vector<8x1xi1>, vector<8x1xi32>
    %373 = vector.shape_cast %372 : vector<8x1xi32> to vector<1x8x1xi32>
    %cst_68 = arith.constant dense<2147483647> : vector<1xi32>
    %374 = vector.multi_reduction <minsi>, %373, %cst_68 [1, 2] : vector<1x8x1xi32> to vector<1xi32>
    %375 = vector.shape_cast %374 : vector<1xi32> to vector<1x1x1xi32>
    %376 = vector.extract %375[0, 0, 0] : i32 from vector<1x1x1xi32>
    %377 = vector.broadcast %368 : f32 to vector<8x1xf32>
    %378 = arith.subf %359, %377 : vector<8x1xf32>
    %cst_69 = arith.constant -1.000000e+30 : f32
    %379 = vector.broadcast %cst_69 : f32 to vector<8x1xf32>
    %380 = arith.select %361, %378, %379 : vector<8x1xi1>, vector<8x1xf32>
    %381 = math.exp %380 : vector<8x1xf32>
    %382 = vector.shape_cast %381 : vector<8x1xf32> to vector<1x8x1xf32>
    %cst_70 = arith.constant dense<0.000000e+00> : vector<1xf32>
    %383 = vector.multi_reduction <add>, %382, %cst_70 [1, 2] : vector<1x8x1xf32> to vector<1xf32>
    %384 = vector.shape_cast %383 : vector<1xf32> to vector<1x1x1xf32>
    %385 = vector.extract %384[0, 0, 0] : f32 from vector<1x1x1xf32>
    %386 = math.log %385 : f32
    %387 = arith.addf %328, %386 : f32
    %c7 = arith.constant 7 : index
    %388 = memref.load %arg8[%c7] : memref<8xi32, #tpu.memory_space<smem>>
    memref.store %376, %arg8[%c7] : memref<8xi32, #tpu.memory_space<smem>>
    %cst_71 = arith.constant 6.000010e+00 : f32
    %389 = arith.divf %387, %cst_71 : f32
    %c0_72 = arith.constant 0 : index
    %390 = memref.load %arg9[%c0_72] : memref<1xf32, #tpu.memory_space<smem>>
    memref.store %389, %arg9[%c0_72] : memref<1xf32, #tpu.memory_space<smem>>
    return
  }
}

</mosaic_0001>

<llo_original>
// kernel: tpu_custom_call.1
$region0: #{tpu_custom_call.1}
  #allocation0 [shape = 'u32[]', space=smem, size = 0x4, offset = 0x4, fixed_abs, tag = 'smem constant byte address 0x4 - core index']
  #allocation1 [shape = 'u32[144,128]{1,0:T(1,128)}', space=vmem, size = 0x12000, scoped, tag = 'internal scratch']
  #allocation2 [shape = 'f32[1]{0:T(128)S(6)}', space=smem, size = 0x200, scoped, tag = 'scoped memory for tpu_custom_call.1']
  %s0 = inlined_call_operand.hbm [shape: f32[8,32], index: 0, kind: input, shape index: {}]
  %s1 = inlined_call_operand.vmem [shape: f32[1,32], index: 1, kind: input, shape index: {}]
  %s2 = inlined_call_operand.vmem [shape: f32[1,32], index: 2, kind: input, shape index: {}]
  %s3 = inlined_call_operand.hbm [shape: f32[32,160], index: 3, kind: input, shape index: {}]
  %s4 = inlined_call_operand.vmem [shape: f32[1,128], index: 4, kind: input, shape index: {}]
  %s5 = inlined_call_operand.hbm [shape: f32[32,160], index: 5, kind: input, shape index: {}]
  %s6 = inlined_call_operand.vmem [shape: f32[1,64], index: 6, kind: input, shape index: {}]
  %s7 = inlined_call_operand.<no memory space> [shape: f32[1], index: 7, kind: input, shape index: {}]
  %s8 = inlined_call_operand.hbm [shape: s32[8], index: 8, kind: output, shape index: {0}]
  %s9 = inlined_call_operand.hbm [shape: f32[1], index: 9, kind: output, shape index: {1}]
  %10 = xla_tuple %s8, %s9
  %s11 = sld [smem:[#allocation0]]
  $region62: #{tpu_custom_call.1} parent=0
    _
  %s13 = ssub.s32 1, %s11
  %s14 = scalar_select 0, %s13, %s11
  %15 = sst [smem:[#allocation2]] %s7
  $region1: #{tpu_custom_call.1} parent=0
    #allocation3 [shape = 'u8[4096]{0}', space=vmem, size = 0x1000, scoped, tag = 'input window, operand 0, single buffered']
    #allocation4 [shape = 's32[1]{0}', space=sflag, size = 0x4, scoped, tag = 'scoped memory for tpu_custom_call.1']
    #allocation5 [shape = 's32[1]{0}', space=sflag, size = 0x4, scoped, tag = 'scoped memory for tpu_custom_call.1']
    #allocation6 [shape = 'u8[32768]{0}', space=vmem, size = 0x8000, scoped, tag = 'input window, operand 3, single buffered']
    #allocation7 [shape = 's32[1]{0}', space=sflag, size = 0x4, scoped, tag = 'scoped memory for tpu_custom_call.1']
    #allocation8 [shape = 'u8[32768]{0}', space=vmem, size = 0x8000, scoped, tag = 'input window, operand 5, single buffered']
    #allocation9 [shape = 'u8[512]{0}', space=smem, size = 0x200, scoped, tag = 'output window, operand 0, single buffered']
    #allocation10 [shape = 'u8[512]{0}', space=smem, size = 0x200, scoped, tag = 'output window, operand 1, single buffered']
    #allocation11 [shape = 's32[1]{0}', space=sflag, size = 0x4, scoped, tag = 'scoped memory for tpu_custom_call.1']
    %16 = vsyncpa [#allocation4], 0
    %17 = vsyncpa [#allocation7], 0
    %18 = vsyncpa [#allocation5], 0
    %19 = vsyncpa [#allocation11], 0
    // Predicated region
    $region2: #{tpu_custom_call.1} parent=1 // pred_check
      _
    $region3: #{tpu_custom_call.1} parent=1 // pred_check_branch
      %21 = sbr.rel (0) target = $region5
    $region4: #{tpu_custom_call.1} parent=1 // pred_region
      %s23 = ssub.s32 128, 128
      %24 = vsyncadd [#allocation4], %s23
      %s26 = sshll.u32 [#allocation3], 4
      %s27 = int_to_ptr.vmem [resolvable:$true] %s26
      %29 = dma.hbm_to_vmem [thread:$0]  %s0, 128, %s27, [#allocation4]
    $region5: #{tpu_custom_call.1} parent=1 // pred_fallthru
      _
    // Predicated region
    $region6: #{tpu_custom_call.1} parent=1 // pred_check
      _
    $region7: #{tpu_custom_call.1} parent=1 // pred_check_branch
      %31 = sbr.rel (0) target = $region9
    $region8: #{tpu_custom_call.1} parent=1 // pred_region
      _
    $region9: #{tpu_custom_call.1} parent=1 // pred_fallthru
      _
    // Predicated region
    $region10: #{tpu_custom_call.1} parent=1 // pred_check
      _
    $region11: #{tpu_custom_call.1} parent=1 // pred_check_branch
      %33 = sbr.rel (0) target = $region13
    $region12: #{tpu_custom_call.1} parent=1 // pred_region
      _
    $region13: #{tpu_custom_call.1} parent=1 // pred_fallthru
      _
    // Predicated region
    $region14: #{tpu_custom_call.1} parent=1 // pred_check
      _
    $region15: #{tpu_custom_call.1} parent=1 // pred_check_branch
      %35 = sbr.rel (0) target = $region17
    $region16: #{tpu_custom_call.1} parent=1 // pred_region
      %s37 = ssub.s32 1024, 1024
      %38 = vsyncadd [#allocation7], %s37
      %s39 = sshll.u32 [#allocation6], 4
      %s40 = int_to_ptr.vmem [resolvable:$true] %s39
      %45 = dma.hbm_to_vmem [thread:$0]  %s3, 1024, %s40, [#allocation7], 256, 256, 16
    $region17: #{tpu_custom_call.1} parent=1 // pred_fallthru
      _
    // Predicated region
    $region18: #{tpu_custom_call.1} parent=1 // pred_check
      _
    $region19: #{tpu_custom_call.1} parent=1 // pred_check_branch
      %47 = sbr.rel (0) target = $region21
    $region20: #{tpu_custom_call.1} parent=1 // pred_region
      _
    $region21: #{tpu_custom_call.1} parent=1 // pred_fallthru
      _
    // Predicated region
    $region22: #{tpu_custom_call.1} parent=1 // pred_check
      _
    $region23: #{tpu_custom_call.1} parent=1 // pred_check_branch
      %49 = sbr.rel (0) target = $region25
    $region24: #{tpu_custom_call.1} parent=1 // pred_region
      %s51 = ssub.s32 1024, 1024
      %52 = vsyncadd [#allocation7], %s51
      %s53 = sshll.u32 [#allocation8], 4
      %s54 = int_to_ptr.vmem [resolvable:$true] %s53
      %59 = dma.hbm_to_vmem [thread:$0]  %s5, 1024, %s54, [#allocation7], 256, 256, 16
    $region25: #{tpu_custom_call.1} parent=1 // pred_fallthru
      _
    // Predicated region
    $region26: #{tpu_custom_call.1} parent=1 // pred_check
      _
    $region27: #{tpu_custom_call.1} parent=1 // pred_check_branch
      %61 = sbr.rel (0) target = $region29
    $region28: #{tpu_custom_call.1} parent=1 // pred_region
      _
    $region29: #{tpu_custom_call.1} parent=1 // pred_fallthru
      _
    // Predicated region
    $region30: #{tpu_custom_call.1} parent=1 // pred_check
      _
    $region31: #{tpu_custom_call.1} parent=1 // pred_check_branch
      %63 = sbr.rel (0) target = $region33
    $region32: #{tpu_custom_call.1} parent=1 // pred_region
      _
    $region33: #{tpu_custom_call.1} parent=1 // pred_fallthru
      _
    // Predicated region
    $region34: #{tpu_custom_call.1} parent=1 // pred_check
      _
    $region35: #{tpu_custom_call.1} parent=1 // pred_check_branch
      %65 = sbr.rel (0) target = $region37
    $region36: #{tpu_custom_call.1} parent=1 // pred_region
      %66 = dma.done [#allocation4], 128
    $region37: #{tpu_custom_call.1} parent=1 // pred_fallthru
      _
    // Predicated region
    $region38: #{tpu_custom_call.1} parent=1 // pred_check
      _
    $region39: #{tpu_custom_call.1} parent=1 // pred_check_branch
      %68 = sbr.rel (0) target = $region41
    $region40: #{tpu_custom_call.1} parent=1 // pred_region
      %69 = dma.done [#allocation7], 1024
    $region41: #{tpu_custom_call.1} parent=1 // pred_fallthru
      _
    // Predicated region
    $region42: #{tpu_custom_call.1} parent=1 // pred_check
      _
    $region43: #{tpu_custom_call.1} parent=1 // pred_check_branch
      %71 = sbr.rel (0) target = $region45
    $region44: #{tpu_custom_call.1} parent=1 // pred_region
      %72 = dma.done [#allocation7], 1024
    $region45: #{tpu_custom_call.1} parent=1 // pred_fallthru
      _
    %v73 = vld [vmem:[#allocation3] sm:$0xff]
    %v74 = vld [vmem:[#allocation6] sm:$0xff]
    %v75 = vld [vmem:[#allocation6 + $0x8] sm:$0xff]
    %v76 = vld [vmem:[#allocation6 + $0x10] sm:$0xff]
    %v77 = vld [vmem:[#allocation6 + $0x18] sm:$0xff]
    %v78 = vld [vmem:[#allocation6 + $0x20] sm:$0xff]
    %v79 = vld [vmem:[#allocation6 + $0x28] sm:$0xff]
    %v80 = vld [vmem:[#allocation6 + $0x30] sm:$0xff]
    %v81 = vld [vmem:[#allocation6 + $0x38] sm:$0xff]
    %vm82 = vcmask 261120
    %v84 = vsel %vm82, %v73, 0
    %86 = vmatprep.subr.mxu0 %v75
    %87 = vmatpush1.msra.mxu0 %v74
    %88 = vmatprep.subr.mxu0 %v77
    %89 = vmatpush1.msra.mxu0 %v76
    %90 = vmatprep.subr.mxu0 %v79
    %91 = vmatpush1.msra.mxu0 %v78
    %92 = vmatprep.subr.mxu0 %v81
    %93 = vmatpush1.msra.mxu0 %v80
    %94 = vmatprep.subr.mxu0 0.0
    %95 = vmatpush1.msra.mxu0 0.0
    %96 = vmatprep.subr.mxu0 0.0
    %97 = vmatpush1.msra.mxu0 0.0
    %98 = vmatprep.subr.mxu0 0.0
    %99 = vmatpush1.msra.mxu0 0.0
    %100 = vmatprep.subr.mxu0 0.0
    %101 = vmatpush1.msra.mxu0 0.0
    %102 = vmatprep.subr.mxu0 0.0
    %103 = vmatpush1.msra.mxu0 0.0
    %104 = vmatprep.subr.mxu0 0.0
    %105 = vmatpush1.msra.mxu0 0.0
    %106 = vmatprep.subr.mxu0 0.0
    %107 = vmatpush1.msra.mxu0 0.0
    %108 = vmatprep.subr.mxu0 0.0
    %109 = vmatpush1.msra.mxu0 0.0
    %110 = vmatprep.subr.mxu0 0.0
    %111 = vmatpush1.msra.mxu0 0.0
    %112 = vmatprep.subr.mxu0 0.0
    %113 = vmatpush1.msra.mxu0 0.0
    %114 = vmatprep.subr.mxu0 0.0
    %115 = vmatpush1.msra.mxu0 0.0
    %116 = vmatprep.subr.mxu0 0.0
    %117 = vmatpush1.msra.mxu0 0.0
    %118 = vmatprep.subr.mxu0 0.0
    %119 = vmatpush1.msra.mxu0 0.0
    %120 = vmatprep.subr.mxu0 0.0
    %121 = vmatpush1.msra.mxu0 0.0
    %122 = vmatprep.subr.mxu0 0.0
    %123 = vmatpush1.msra.mxu0 0.0
    %124 = vmatprep.subr.mxu0 0.0
    %125 = vmatpush1.msra.mxu0 0.0
    %126 = vmatprep.subr.mxu0 0.0
    %127 = vmatpush1.msra.mxu0 0.0
    %128 = vmatprep.subr.mxu0 0.0
    %129 = vmatpush1.msra.mxu0 0.0
    %130 = vmatprep.subr.mxu0 0.0
    %131 = vmatpush1.msra.mxu0 0.0
    %132 = vmatprep.subr.mxu0 0.0
    %133 = vmatpush1.msra.mxu0 0.0
    %134 = vmatprep.subr.mxu0 0.0
    %135 = vmatpush1.msra.mxu0 0.0
    %136 = vmatprep.subr.mxu0 0.0
    %137 = vmatpush1.msra.mxu0 0.0
    %138 = vmatprep.subr.mxu0 0.0
    %139 = vmatpush1.msra.mxu0 0.0
    %140 = vmatprep.subr.mxu0 0.0
    %141 = vmatpush1.msra.mxu0 0.0
    %142 = vmatprep.subr.mxu0 0.0
    %143 = vmatpush1.msra.mxu0 0.0
    %144 = vmatprep.subr.mxu0 0.0
    %145 = vmatpush1.msra.mxu0 0.0
    %146 = vmatprep.subr.mxu0 0.0
    %147 = vmatpush1.msra.mxu0 0.0
    %148 = vmatprep.subr.mxu0 0.0
    %149 = vmatpush1.msra.mxu0 0.0
    %150 = vmatprep.mubr.f32.mxu0 0.0
    %151 = vmatmul.mubr.f32.gmra.mrb[0].mxu0 %v84
    %v152 = vpop.f32.mrb[0].mxu0
    %v153 = vadd.f32 0.0, %v152
    %v154 = vpop.f32.mrb[0].mxu0
    %v155 = vadd.f32 0.0, %v154
    %156 = vdwg.mxu0
    %v157 = vld [vmem:[%s4] sm:$0x1]
    %v159 = vlaneseq
    %v160 = vshrl.u32 %v159, 7
    %v161 = vsub.s32 0, %v160
    %v162 = vrot.slane %v157, %v161
    %v164 = vadd.f32 %v153, %v162
    %v165 = vld [vmem:[#allocation8] sm:$0xff]
    %v166 = vld [vmem:[#allocation8 + $0x8] sm:$0xff]
    %v167 = vld [vmem:[#allocation8 + $0x10] sm:$0xff]
    %v168 = vld [vmem:[#allocation8 + $0x18] sm:$0xff]
    %v169 = vld [vmem:[#allocation8 + $0x20] sm:$0xff]
    %v170 = vld [vmem:[#allocation8 + $0x28] sm:$0xff]
    %v171 = vld [vmem:[#allocation8 + $0x30] sm:$0xff]
    %v172 = vld [vmem:[#allocation8 + $0x38] sm:$0xff]
    %v173 = vld [vmem:[%s6] sm:$0x1]
    %s174 = sld [smem:[#allocation2]]
    %v175 = vlaneseq
    %v176 = vshrl.u32 %v175, 7
    %s177 = scalar_lea.smem [#allocation9], 0
    %178 = sst [smem:[%s177]] 0
    %s179 = scalar_lea.smem [#allocation9], 1
    %180 = sst [smem:[%s179]] 0
    %v181 = vld [vmem:[%s1] sm:$0x1]
    %v182 = vld [vmem:[%s2] sm:$0x1]
    %v184 = vsel %vm82, %v181, 0
    %186 = vmatprep.subr.mxu0 %v166
    %187 = vmatpush1.msra.mxu0 %v165
    %188 = vmatprep.subr.mxu0 %v168
    %189 = vmatpush1.msra.mxu0 %v167
    %190 = vmatprep.subr.mxu0 %v170
    %191 = vmatpush1.msra.mxu0 %v169
    %192 = vmatprep.subr.mxu0 %v172
    %193 = vmatpush1.msra.mxu0 %v171
    %194 = vmatprep.subr.mxu0 0.0
    %195 = vmatpush1.msra.mxu0 0.0
    %196 = vmatprep.subr.mxu0 0.0
    %197 = vmatpush1.msra.mxu0 0.0
    %198 = vmatprep.subr.mxu0 0.0
    %199 = vmatpush1.msra.mxu0 0.0
    %200 = vmatprep.subr.mxu0 0.0
    %201 = vmatpush1.msra.mxu0 0.0
    %202 = vmatprep.subr.mxu0 0.0
    %203 = vmatpush1.msra.mxu0 0.0
    %204 = vmatprep.subr.mxu0 0.0
    %205 = vmatpush1.msra.mxu0 0.0
    %206 = vmatprep.subr.mxu0 0.0
    %207 = vmatpush1.msra.mxu0 0.0
    %208 = vmatprep.subr.mxu0 0.0
    %209 = vmatpush1.msra.mxu0 0.0
    %210 = vmatprep.subr.mxu0 0.0
    %211 = vmatpush1.msra.mxu0 0.0
    %212 = vmatprep.subr.mxu0 0.0
    %213 = vmatpush1.msra.mxu0 0.0
    %214 = vmatprep.subr.mxu0 0.0
    %215 = vmatpush1.msra.mxu0 0.0
    %216 = vmatprep.subr.mxu0 0.0
    %217 = vmatpush1.msra.mxu0 0.0
    %218 = vmatprep.subr.mxu0 0.0
    %219 = vmatpush1.msra.mxu0 0.0
    %220 = vmatprep.subr.mxu0 0.0
    %221 = vmatpush1.msra.mxu0 0.0
    %222 = vmatprep.subr.mxu0 0.0
    %223 = vmatpush1.msra.mxu0 0.0
    %224 = vmatprep.subr.mxu0 0.0
    %225 = vmatpush1.msra.mxu0 0.0
    %226 = vmatprep.subr.mxu0 0.0
    %227 = vmatpush1.msra.mxu0 0.0
    %228 = vmatprep.subr.mxu0 0.0
    %229 = vmatpush1.msra.mxu0 0.0
    %230 = vmatprep.subr.mxu0 0.0
    %231 = vmatpush1.msra.mxu0 0.0
    %232 = vmatprep.subr.mxu0 0.0
    %233 = vmatpush1.msra.mxu0 0.0
    %234 = vmatprep.subr.mxu0 0.0
    %235 = vmatpush1.msra.mxu0 0.0
    %236 = vmatprep.subr.mxu0 0.0
    %237 = vmatpush1.msra.mxu0 0.0
    %238 = vmatprep.subr.mxu0 0.0
    %239 = vmatpush1.msra.mxu0 0.0
    %240 = vmatprep.subr.mxu0 0.0
    %241 = vmatpush1.msra.mxu0 0.0
    %242 = vmatprep.subr.mxu0 0.0
    %243 = vmatpush1.msra.mxu0 0.0
    %244 = vmatprep.subr.mxu0 0.0
    %245 = vmatpush1.msra.mxu0 0.0
    %246 = vmatprep.subr.mxu0 0.0
    %247 = vmatpush1.msra.mxu0 0.0
    %248 = vmatprep.subr.mxu0 0.0
    %249 = vmatpush1.msra.mxu0 0.0
    %250 = vmatprep.mubr.f32.mxu0 0.0
    %251 = vmatmul.mubr.f32.gmra.mrb[0].mxu0 %v184
    %v252 = vpop.f32.mrb[0].mxu0
    %v253 = vadd.f32 0.0, %v252
    %v254 = vpop.f32.mrb[0].mxu0
    %255 = vdwg.mxu0
    %v257 = vrot.slane %v253, 6
    %v259 = vadd.f32 %v164, %v257
    %v260 = vxor.u32 %v259, 2147483648
    %v261 = vmul.f32 %v260, 1.442695
    %v262 = vpow.pop %v261
    %v263 = vadd.f32 %v262, 1.0
    %v264 = vrcp.pop %v263
    %v265 = vmul.f32 1.0, %v264
    %v266 = vtanh.pop %v259
    %v268 = vlaneseq
    %v269 = vshrl.u32 %v268, 7
    %v270 = vsub.s32 0, %v269
    %v271 = vrot.slane %v182, %v270
    %272 = vrot.lane.b32.xlu0 %v271, 32
    %v273 = vpop.permute.xlu0 %272
    %v275 = vmul.f32 %v265, %v273
    %277 = vrot.lane.b32.xlu0 %v266, 32
    %v278 = vpop.permute.xlu0 %277
    %v280 = vmul.f32 %v265, %v278
    %282 = vrot.lane.b32.xlu0 %v280, 32
    %v283 = vpop.permute.xlu0 %282
    %v285 = vadd.f32 %v275, %v283
    %v286 = vtanh.pop %v285
    %288 = vrot.lane.b32.xlu0 %v286, 32
    %v289 = vpop.permute.xlu0 %288
    %v291 = vmul.f32 %v265, %v289
    %v293 = vrot.slane %v291, 2
    %294 = vrot.lane.b32.xlu0 %v293, 64
    %v295 = vpop.permute.xlu0 %294
    %v296 = vsel %vm82, %v295, 0
    %298 = vmatprep.subr.mxu0 %v166
    %299 = vmatpush1.msra.mxu0 %v165
    %300 = vmatprep.subr.mxu0 %v168
    %301 = vmatpush1.msra.mxu0 %v167
    %302 = vmatprep.subr.mxu0 %v170
    %303 = vmatpush1.msra.mxu0 %v169
    %304 = vmatprep.subr.mxu0 %v172
    %305 = vmatpush1.msra.mxu0 %v171
    %306 = vmatprep.subr.mxu0 0.0
    %307 = vmatpush1.msra.mxu0 0.0
    %308 = vmatprep.subr.mxu0 0.0
    %309 = vmatpush1.msra.mxu0 0.0
    %310 = vmatprep.subr.mxu0 0.0
    %311 = vmatpush1.msra.mxu0 0.0
    %312 = vmatprep.subr.mxu0 0.0
    %313 = vmatpush1.msra.mxu0 0.0
    %314 = vmatprep.subr.mxu0 0.0
    %315 = vmatpush1.msra.mxu0 0.0
    %316 = vmatprep.subr.mxu0 0.0
    %317 = vmatpush1.msra.mxu0 0.0
    %318 = vmatprep.subr.mxu0 0.0
    %319 = vmatpush1.msra.mxu0 0.0
    %320 = vmatprep.subr.mxu0 0.0
    %321 = vmatpush1.msra.mxu0 0.0
    %322 = vmatprep.subr.mxu0 0.0
    %323 = vmatpush1.msra.mxu0 0.0
    %324 = vmatprep.subr.mxu0 0.0
    %325 = vmatpush1.msra.mxu0 0.0
    %326 = vmatprep.subr.mxu0 0.0
    %327 = vmatpush1.msra.mxu0 0.0
    %328 = vmatprep.subr.mxu0 0.0
    %329 = vmatpush1.msra.mxu0 0.0
    %330 = vmatprep.subr.mxu0 0.0
    %331 = vmatpush1.msra.mxu0 0.0
    %332 = vmatprep.subr.mxu0 0.0
    %333 = vmatpush1.msra.mxu0 0.0
    %334 = vmatprep.subr.mxu0 0.0
    %335 = vmatpush1.msra.mxu0 0.0
    %336 = vmatprep.subr.mxu0 0.0
    %337 = vmatpush1.msra.mxu0 0.0
    %338 = vmatprep.subr.mxu0 0.0
    %339 = vmatpush1.msra.mxu0 0.0
    %340 = vmatprep.subr.mxu0 0.0
    %341 = vmatpush1.msra.mxu0 0.0
    %342 = vmatprep.subr.mxu0 0.0
    %343 = vmatpush1.msra.mxu0 0.0
    %344 = vmatprep.subr.mxu0 0.0
    %345 = vmatpush1.msra.mxu0 0.0
    %346 = vmatprep.subr.mxu0 0.0
    %347 = vmatpush1.msra.mxu0 0.0
    %348 = vmatprep.subr.mxu0 0.0
    %349 = vmatpush1.msra.mxu0 0.0
    %350 = vmatprep.subr.mxu0 0.0
    %351 = vmatpush1.msra.mxu0 0.0
    %352 = vmatprep.subr.mxu0 0.0
    %353 = vmatpush1.msra.mxu0 0.0
    %354 = vmatprep.subr.mxu0 0.0
    %355 = vmatpush1.msra.mxu0 0.0
    %356 = vmatprep.subr.mxu0 0.0
    %357 = vmatpush1.msra.mxu0 0.0
    %358 = vmatprep.subr.mxu0 0.0
    %359 = vmatpush1.msra.mxu0 0.0
    %360 = vmatprep.subr.mxu0 0.0
    %361 = vmatpush1.msra.mxu0 0.0
    %362 = vmatprep.mubr.f32.mxu0 0.0
    %363 = vmatmul.mubr.f32.gmra.mrb[0].mxu0 %v296
    %v364 = vpop.f32.mrb[0].mxu0
    %v365 = vadd.f32 0.0, %v364
    %v366 = vpop.f32.mrb[0].mxu0
    %v367 = vadd.f32 0.0, %v366
    %368 = vdwg.mxu0
    %v370 = vrot.slane %v365, 5
    %v372 = vadd.f32 %v164, %v370
    %v373 = vlaneseq
    %v374 = vshrl.u32 %v373, 7
    %v375 = vsub.s32 0, %v374
    %v376 = vrot.slane %v367, %v375
    %v377 = vmul.f32 %v155, %v376
    %v378 = vsub.f32 %v155, %v376
    %380 = vrot.lane.b32.xlu0 %v378, 32
    %v381 = vpop.permute.xlu0 %380
    %v383 = vsel %vm82, %v377, %v381
    %v384 = vtanh.pop %v383
    %v386 = vlaneseq
    %v387 = vshrl.u32 %v386, 7
    %v388 = vsub.s32 0, %v387
    %v389 = vrot.slane %v173, %v388
    %v391 = vmul.f32 %v384, %v389
    %vm392 = vcmask 523264
    %v393 = vsel %vm392, %v391, 0.0
    %394 = vadd.xlane.f32.xlu0 %v393
    %v395 = vpop.xlane.xlu0 %394
    %v396 = vstv %s174
    %v397 = vadd.f32 %v395, %v396
    %vm398 = vcmp.lt.s32.totalorder %v176, 2
    %v399 = vsub.f32 %v397, 10000.0
    %v400 = vsel %vm398, %v397, %v399
    %v401 = vrot.slane %v400, 4
    %v402 = vmax.f32 %v400, %v401
    %v403 = vrot.slane %v402, 2
    %v404 = vmax.f32 %v402, %v403
    %v405 = vrot.slane %v404, 1
    %v406 = vmax.f32 %v404, %v405
    %s407 = vtos %v406
    %v408 = vstv %s407
    %vm409 = vcmp.eq.f32.partialorder %v400, %v408
    %v410 = vsel %vm409, %v176, 8
    %v411 = vrot.slane %v410, 4
    %vm412 = vcmp.lt.s32.totalorder %v410, %v411
    %v413 = vsel %vm412, %v410, %v411
    %v414 = vrot.slane %v413, 2
    %vm415 = vcmp.lt.s32.totalorder %v413, %v414
    %v416 = vsel %vm415, %v413, %v414
    %v417 = vrot.slane %v416, 1
    %vm418 = vcmp.lt.s32.totalorder %v416, %v417
    %v419 = vsel %vm418, %v416, %v417
    %s420 = vtos %v419
    %v421 = vsub.f32 %v397, %v408
    %v422 = vsel %vm398, %v421, -1e+30
    %v423 = vmul.f32 %v422, 1.442695
    %v424 = vpow.pop %v423
    %vm425 = vcmask 7168
    %v426 = vsel %vm425, %v424, 0.0
    %427 = vadd.xlane.f32.xlu0 %v426
    %v428 = vpop.xlane.xlu0 %427
    %v429 = vrot.slane %v428, 4
    %v430 = vadd.f32 %v428, %v429
    %v431 = vrot.slane %v430, 2
    %v432 = vadd.f32 %v430, %v431
    %v433 = vrot.slane %v432, 1
    %v434 = vadd.f32 %v432, %v433
    %s435 = vtos %v434
    %v436 = vstv %s435
    %v437 = vlog2.pop %v436
    %v438 = vmul.f32 %v437, 0.6931472
    %s439 = vtos %v438
    %s440 = sadd.f32 %s439, 0.0
    %s441 = scalar_lea.smem [#allocation9], 2
    %442 = sst [smem:[%s441]] %s420
    %v443 = vxor.u32 %v372, 2147483648
    %v444 = vmul.f32 %v443, 1.442695
    %v445 = vpow.pop %v444
    %v446 = vadd.f32 %v445, 1.0
    %v447 = vrcp.pop %v446
    %v448 = vmul.f32 1.0, %v447
    %v449 = vtanh.pop %v372
    %v451 = vrot.slane %v285, 7
    %v453 = vmul.f32 %v448, %v451
    %455 = vrot.lane.b32.xlu0 %v449, 32
    %v456 = vpop.permute.xlu0 %455
    %v458 = vmul.f32 %v448, %v456
    %460 = vrot.lane.b32.xlu0 %v458, 32
    %v461 = vpop.permute.xlu0 %460
    %v463 = vadd.f32 %v453, %v461
    %v464 = vtanh.pop %v463
    %466 = vrot.lane.b32.xlu0 %v464, 32
    %v467 = vpop.permute.xlu0 %466
    %v469 = vmul.f32 %v448, %v467
    %v471 = vrot.slane %v469, 3
    %472 = vrot.lane.b32.xlu0 %v471, 64
    %v473 = vpop.permute.xlu0 %472
    %v474 = vsel %vm82, %v473, 0
    %476 = vmatprep.subr.mxu0 %v166
    %477 = vmatpush1.msra.mxu0 %v165
    %478 = vmatprep.subr.mxu0 %v168
    %479 = vmatpush1.msra.mxu0 %v167
    %480 = vmatprep.subr.mxu0 %v170
    %481 = vmatpush1.msra.mxu0 %v169
    %482 = vmatprep.subr.mxu0 %v172
    %483 = vmatpush1.msra.mxu0 %v171
    %484 = vmatprep.subr.mxu0 0.0
    %485 = vmatpush1.msra.mxu0 0.0
    %486 = vmatprep.subr.mxu0 0.0
    %487 = vmatpush1.msra.mxu0 0.0
    %488 = vmatprep.subr.mxu0 0.0
    %489 = vmatpush1.msra.mxu0 0.0
    %490 = vmatprep.subr.mxu0 0.0
    %491 = vmatpush1.msra.mxu0 0.0
    %492 = vmatprep.subr.mxu0 0.0
    %493 = vmatpush1.msra.mxu0 0.0
    %494 = vmatprep.subr.mxu0 0.0
    %495 = vmatpush1.msra.mxu0 0.0
    %496 = vmatprep.subr.mxu0 0.0
    %497 = vmatpush1.msra.mxu0 0.0
    %498 = vmatprep.subr.mxu0 0.0
    %499 = vmatpush1.msra.mxu0 0.0
    %500 = vmatprep.subr.mxu0 0.0
    %501 = vmatpush1.msra.mxu0 0.0
    %502 = vmatprep.subr.mxu0 0.0
    %503 = vmatpush1.msra.mxu0 0.0
    %504 = vmatprep.subr.mxu0 0.0
    %505 = vmatpush1.msra.mxu0 0.0
    %506 = vmatprep.subr.mxu0 0.0
    %507 = vmatpush1.msra.mxu0 0.0
    %508 = vmatprep.subr.mxu0 0.0
    %509 = vmatpush1.msra.mxu0 0.0
    %510 = vmatprep.subr.mxu0 0.0
    %511 = vmatpush1.msra.mxu0 0.0
    %512 = vmatprep.subr.mxu0 0.0
    %513 = vmatpush1.msra.mxu0 0.0
    %514 = vmatprep.subr.mxu0 0.0
    %515 = vmatpush1.msra.mxu0 0.0
    %516 = vmatprep.subr.mxu0 0.0
    %517 = vmatpush1.msra.mxu0 0.0
    %518 = vmatprep.subr.mxu0 0.0
    %519 = vmatpush1.msra.mxu0 0.0
    %520 = vmatprep.subr.mxu0 0.0
    %521 = vmatpush1.msra.mxu0 0.0
    %522 = vmatprep.subr.mxu0 0.0
    %523 = vmatpush1.msra.mxu0 0.0
    %524 = vmatprep.subr.mxu0 0.0
    %525 = vmatpush1.msra.mxu0 0.0
    %526 = vmatprep.subr.mxu0 0.0
    %527 = vmatpush1.msra.mxu0 0.0
    %528 = vmatprep.subr.mxu0 0.0
    %529 = vmatpush1.msra.mxu0 0.0
    %530 = vmatprep.subr.mxu0 0.0
    %531 = vmatpush1.msra.mxu0 0.0
    %532 = vmatprep.subr.mxu0 0.0
    %533 = vmatpush1.msra.mxu0 0.0
    %534 = vmatprep.subr.mxu0 0.0
    %535 = vmatpush1.msra.mxu0 0.0
    %536 = vmatprep.subr.mxu0 0.0
    %537 = vmatpush1.msra.mxu0 0.0
    %538 = vmatprep.subr.mxu0 0.0
    %539 = vmatpush1.msra.mxu0 0.0
    %540 = vmatprep.mubr.f32.mxu0 0.0
    %541 = vmatmul.mubr.f32.gmra.mrb[0].mxu0 %v474
    %v542 = vpop.f32.mrb[0].mxu0
    %v543 = vadd.f32 0.0, %v542
    %v544 = vpop.f32.mrb[0].mxu0
    %v545 = vadd.f32 0.0, %v544
    %546 = vdwg.mxu0
    %v548 = vrot.slane %v543, 4
    %v550 = vadd.f32 %v164, %v548
    %v551 = vlaneseq
    %v552 = vshrl.u32 %v551, 7
    %v553 = vsub.s32 0, %v552
    %v554 = vrot.slane %v545, %v553
    %v555 = vmul.f32 %v155, %v554
    %v556 = vsub.f32 %v155, %v554
    %558 = vrot.lane.b32.xlu0 %v556, 32
    %v559 = vpop.permute.xlu0 %558
    %v561 = vsel %vm82, %v555, %v559
    %v562 = vtanh.pop %v561
    %v563 = vmul.f32 %v562, %v389
    %v564 = vsel %vm392, %v563, 0.0
    %565 = vadd.xlane.f32.xlu0 %v564
    %v566 = vpop.xlane.xlu0 %565
    %v567 = vadd.f32 %v566, %v396
    %vm568 = vcmp.lt.s32.totalorder %v176, 3
    %v569 = vsub.f32 %v567, 10000.0
    %v570 = vsel %vm568, %v567, %v569
    %v571 = vrot.slane %v570, 4
    %v572 = vmax.f32 %v570, %v571
    %v573 = vrot.slane %v572, 2
    %v574 = vmax.f32 %v572, %v573
    %v575 = vrot.slane %v574, 1
    %v576 = vmax.f32 %v574, %v575
    %s577 = vtos %v576
    %v578 = vstv %s577
    %vm579 = vcmp.eq.f32.partialorder %v570, %v578
    %v580 = vsel %vm579, %v176, 8
    %v581 = vrot.slane %v580, 4
    %vm582 = vcmp.lt.s32.totalorder %v580, %v581
    %v583 = vsel %vm582, %v580, %v581
    %v584 = vrot.slane %v583, 2
    %vm585 = vcmp.lt.s32.totalorder %v583, %v584
    %v586 = vsel %vm585, %v583, %v584
    %v587 = vrot.slane %v586, 1
    %vm588 = vcmp.lt.s32.totalorder %v586, %v587
    %v589 = vsel %vm588, %v586, %v587
    %s590 = vtos %v589
    %v591 = vsub.f32 %v567, %v578
    %v592 = vsel %vm568, %v591, -1e+30
    %v593 = vmul.f32 %v592, 1.442695
    %v594 = vpow.pop %v593
    %v595 = vsel %vm425, %v594, 0.0
    %596 = vadd.xlane.f32.xlu0 %v595
    %v597 = vpop.xlane.xlu0 %596
    %v598 = vrot.slane %v597, 4
    %v599 = vadd.f32 %v597, %v598
    %v600 = vrot.slane %v599, 2
    %v601 = vadd.f32 %v599, %v600
    %v602 = vrot.slane %v601, 1
    %v603 = vadd.f32 %v601, %v602
    %s604 = vtos %v603
    %v605 = vstv %s604
    %v606 = vlog2.pop %v605
    %v607 = vmul.f32 %v606, 0.6931472
    %s608 = vtos %v607
    %s609 = sadd.f32 %s440, %s608
    %s610 = scalar_lea.smem [#allocation9], 3
    %611 = sst [smem:[%s610]] %s590
    %v612 = vxor.u32 %v550, 2147483648
    %v613 = vmul.f32 %v612, 1.442695
    %v614 = vpow.pop %v613
    %v615 = vadd.f32 %v614, 1.0
    %v616 = vrcp.pop %v615
    %v617 = vmul.f32 1.0, %v616
    %v618 = vtanh.pop %v550
    %v620 = vrot.slane %v463, 7
    %v622 = vmul.f32 %v617, %v620
    %624 = vrot.lane.b32.xlu0 %v618, 32
    %v625 = vpop.permute.xlu0 %624
    %v627 = vmul.f32 %v617, %v625
    %629 = vrot.lane.b32.xlu0 %v627, 32
    %v630 = vpop.permute.xlu0 %629
    %v632 = vadd.f32 %v622, %v630
    %v633 = vtanh.pop %v632
    %635 = vrot.lane.b32.xlu0 %v633, 32
    %v636 = vpop.permute.xlu0 %635
    %v638 = vmul.f32 %v617, %v636
    %v640 = vrot.slane %v638, 4
    %641 = vrot.lane.b32.xlu0 %v640, 64
    %v642 = vpop.permute.xlu0 %641
    %v643 = vsel %vm82, %v642, 0
    %645 = vmatprep.subr.mxu0 %v166
    %646 = vmatpush1.msra.mxu0 %v165
    %647 = vmatprep.subr.mxu0 %v168
    %648 = vmatpush1.msra.mxu0 %v167
    %649 = vmatprep.subr.mxu0 %v170
    %650 = vmatpush1.msra.mxu0 %v169
    %651 = vmatprep.subr.mxu0 %v172
    %652 = vmatpush1.msra.mxu0 %v171
    %653 = vmatprep.subr.mxu0 0.0
    %654 = vmatpush1.msra.mxu0 0.0
    %655 = vmatprep.subr.mxu0 0.0
    %656 = vmatpush1.msra.mxu0 0.0
    %657 = vmatprep.subr.mxu0 0.0
    %658 = vmatpush1.msra.mxu0 0.0
    %659 = vmatprep.subr.mxu0 0.0
    %660 = vmatpush1.msra.mxu0 0.0
    %661 = vmatprep.subr.mxu0 0.0
    %662 = vmatpush1.msra.mxu0 0.0
    %663 = vmatprep.subr.mxu0 0.0
    %664 = vmatpush1.msra.mxu0 0.0
    %665 = vmatprep.subr.mxu0 0.0
    %666 = vmatpush1.msra.mxu0 0.0
    %667 = vmatprep.subr.mxu0 0.0
    %668 = vmatpush1.msra.mxu0 0.0
    %669 = vmatprep.subr.mxu0 0.0
    %670 = vmatpush1.msra.mxu0 0.0
    %671 = vmatprep.subr.mxu0 0.0
    %672 = vmatpush1.msra.mxu0 0.0
    %673 = vmatprep.subr.mxu0 0.0
    %674 = vmatpush1.msra.mxu0 0.0
    %675 = vmatprep.subr.mxu0 0.0
    %676 = vmatpush1.msra.mxu0 0.0
    %677 = vmatprep.subr.mxu0 0.0
    %678 = vmatpush1.msra.mxu0 0.0
    %679 = vmatprep.subr.mxu0 0.0
    %680 = vmatpush1.msra.mxu0 0.0
    %681 = vmatprep.subr.mxu0 0.0
    %682 = vmatpush1.msra.mxu0 0.0
    %683 = vmatprep.subr.mxu0 0.0
    %684 = vmatpush1.msra.mxu0 0.0
    %685 = vmatprep.subr.mxu0 0.0
    %686 = vmatpush1.msra.mxu0 0.0
    %687 = vmatprep.subr.mxu0 0.0
    %688 = vmatpush1.msra.mxu0 0.0
    %689 = vmatprep.subr.mxu0 0.0
    %690 = vmatpush1.msra.mxu0 0.0
    %691 = vmatprep.subr.mxu0 0.0
    %692 = vmatpush1.msra.mxu0 0.0
    %693 = vmatprep.subr.mxu0 0.0
    %694 = vmatpush1.msra.mxu0 0.0
    %695 = vmatprep.subr.mxu0 0.0
    %696 = vmatpush1.msra.mxu0 0.0
    %697 = vmatprep.subr.mxu0 0.0
    %698 = vmatpush1.msra.mxu0 0.0
    %699 = vmatprep.subr.mxu0 0.0
    %700 = vmatpush1.msra.mxu0 0.0
    %701 = vmatprep.subr.mxu0 0.0
    %702 = vmatpush1.msra.mxu0 0.0
    %703 = vmatprep.subr.mxu0 0.0
    %704 = vmatpush1.msra.mxu0 0.0
    %705 = vmatprep.subr.mxu0 0.0
    %706 = vmatpush1.msra.mxu0 0.0
    %707 = vmatprep.subr.mxu0 0.0
    %708 = vmatpush1.msra.mxu0 0.0
    %709 = vmatprep.mubr.f32.mxu0 0.0
    %710 = vmatmul.mubr.f32.gmra.mrb[0].mxu0 %v643
    %v711 = vpop.f32.mrb[0].mxu0
    %v712 = vadd.f32 0.0, %v711
    %v713 = vpop.f32.mrb[0].mxu0
    %v714 = vadd.f32 0.0, %v713
    %715 = vdwg.mxu0
    %v717 = vrot.slane %v712, 3
    %v719 = vadd.f32 %v164, %v717
    %v720 = vlaneseq
    %v721 = vshrl.u32 %v720, 7
    %v722 = vsub.s32 0, %v721
    %v723 = vrot.slane %v714, %v722
    %v724 = vmul.f32 %v155, %v723
    %v725 = vsub.f32 %v155, %v723
    %727 = vrot.lane.b32.xlu0 %v725, 32
    %v728 = vpop.permute.xlu0 %727
    %v730 = vsel %vm82, %v724, %v728
    %v731 = vtanh.pop %v730
    %v732 = vmul.f32 %v731, %v389
    %v733 = vsel %vm392, %v732, 0.0
    %734 = vadd.xlane.f32.xlu0 %v733
    %v735 = vpop.xlane.xlu0 %734
    %v736 = vadd.f32 %v735, %v396
    %vm737 = vcmp.lt.s32.totalorder %v176, 4
    %v738 = vsub.f32 %v736, 10000.0
    %v739 = vsel %vm737, %v736, %v738
    %v740 = vrot.slane %v739, 4
    %v741 = vmax.f32 %v739, %v740
    %v742 = vrot.slane %v741, 2
    %v743 = vmax.f32 %v741, %v742
    %v744 = vrot.slane %v743, 1
    %v745 = vmax.f32 %v743, %v744
    %s746 = vtos %v745
    %v747 = vstv %s746
    %vm748 = vcmp.eq.f32.partialorder %v739, %v747
    %v749 = vsel %vm748, %v176, 8
    %v750 = vrot.slane %v749, 4
    %vm751 = vcmp.lt.s32.totalorder %v749, %v750
    %v752 = vsel %vm751, %v749, %v750
    %v753 = vrot.slane %v752, 2
    %vm754 = vcmp.lt.s32.totalorder %v752, %v753
    %v755 = vsel %vm754, %v752, %v753
    %v756 = vrot.slane %v755, 1
    %vm757 = vcmp.lt.s32.totalorder %v755, %v756
    %v758 = vsel %vm757, %v755, %v756
    %s759 = vtos %v758
    %v760 = vsub.f32 %v736, %v747
    %v761 = vsel %vm737, %v760, -1e+30
    %v762 = vmul.f32 %v761, 1.442695
    %v763 = vpow.pop %v762
    %v764 = vsel %vm425, %v763, 0.0
    %765 = vadd.xlane.f32.xlu0 %v764
    %v766 = vpop.xlane.xlu0 %765
    %v767 = vrot.slane %v766, 4
    %v768 = vadd.f32 %v766, %v767
    %v769 = vrot.slane %v768, 2
    %v770 = vadd.f32 %v768, %v769
    %v771 = vrot.slane %v770, 1
    %v772 = vadd.f32 %v770, %v771
    %s773 = vtos %v772
    %v774 = vstv %s773
    %v775 = vlog2.pop %v774
    %v776 = vmul.f32 %v775, 0.6931472
    %s777 = vtos %v776
    %s778 = sadd.f32 %s609, %s777
    %s779 = scalar_lea.smem [#allocation9], 4
    %780 = sst [smem:[%s779]] %s759
    %v781 = vxor.u32 %v719, 2147483648
    %v782 = vmul.f32 %v781, 1.442695
    %v783 = vpow.pop %v782
    %v784 = vadd.f32 %v783, 1.0
    %v785 = vrcp.pop %v784
    %v786 = vmul.f32 1.0, %v785
    %v787 = vtanh.pop %v719
    %v789 = vrot.slane %v632, 7
    %v791 = vmul.f32 %v786, %v789
    %793 = vrot.lane.b32.xlu0 %v787, 32
    %v794 = vpop.permute.xlu0 %793
    %v796 = vmul.f32 %v786, %v794
    %798 = vrot.lane.b32.xlu0 %v796, 32
    %v799 = vpop.permute.xlu0 %798
    %v801 = vadd.f32 %v791, %v799
    %v802 = vtanh.pop %v801
    %804 = vrot.lane.b32.xlu0 %v802, 32
    %v805 = vpop.permute.xlu0 %804
    %v807 = vmul.f32 %v786, %v805
    %v809 = vrot.slane %v807, 5
    %810 = vrot.lane.b32.xlu0 %v809, 64
    %v811 = vpop.permute.xlu0 %810
    %v812 = vsel %vm82, %v811, 0
    %814 = vmatprep.subr.mxu0 %v166
    %815 = vmatpush1.msra.mxu0 %v165
    %816 = vmatprep.subr.mxu0 %v168
    %817 = vmatpush1.msra.mxu0 %v167
    %818 = vmatprep.subr.mxu0 %v170
    %819 = vmatpush1.msra.mxu0 %v169
    %820 = vmatprep.subr.mxu0 %v172
    %821 = vmatpush1.msra.mxu0 %v171
    %822 = vmatprep.subr.mxu0 0.0
    %823 = vmatpush1.msra.mxu0 0.0
    %824 = vmatprep.subr.mxu0 0.0
    %825 = vmatpush1.msra.mxu0 0.0
    %826 = vmatprep.subr.mxu0 0.0
    %827 = vmatpush1.msra.mxu0 0.0
    %828 = vmatprep.subr.mxu0 0.0
    %829 = vmatpush1.msra.mxu0 0.0
    %830 = vmatprep.subr.mxu0 0.0
    %831 = vmatpush1.msra.mxu0 0.0
    %832 = vmatprep.subr.mxu0 0.0
    %833 = vmatpush1.msra.mxu0 0.0
    %834 = vmatprep.subr.mxu0 0.0
    %835 = vmatpush1.msra.mxu0 0.0
    %836 = vmatprep.subr.mxu0 0.0
    %837 = vmatpush1.msra.mxu0 0.0
    %838 = vmatprep.subr.mxu0 0.0
    %839 = vmatpush1.msra.mxu0 0.0
    %840 = vmatprep.subr.mxu0 0.0
    %841 = vmatpush1.msra.mxu0 0.0
    %842 = vmatprep.subr.mxu0 0.0
    %843 = vmatpush1.msra.mxu0 0.0
    %844 = vmatprep.subr.mxu0 0.0
    %845 = vmatpush1.msra.mxu0 0.0
    %846 = vmatprep.subr.mxu0 0.0
    %847 = vmatpush1.msra.mxu0 0.0
    %848 = vmatprep.subr.mxu0 0.0
    %849 = vmatpush1.msra.mxu0 0.0
    %850 = vmatprep.subr.mxu0 0.0
    %851 = vmatpush1.msra.mxu0 0.0
    %852 = vmatprep.subr.mxu0 0.0
    %853 = vmatpush1.msra.mxu0 0.0
    %854 = vmatprep.subr.mxu0 0.0
    %855 = vmatpush1.msra.mxu0 0.0
    %856 = vmatprep.subr.mxu0 0.0
    %857 = vmatpush1.msra.mxu0 0.0
    %858 = vmatprep.subr.mxu0 0.0
    %859 = vmatpush1.msra.mxu0 0.0
    %860 = vmatprep.subr.mxu0 0.0
    %861 = vmatpush1.msra.mxu0 0.0
    %862 = vmatprep.subr.mxu0 0.0
    %863 = vmatpush1.msra.mxu0 0.0
    %864 = vmatprep.subr.mxu0 0.0
    %865 = vmatpush1.msra.mxu0 0.0
    %866 = vmatprep.subr.mxu0 0.0
    %867 = vmatpush1.msra.mxu0 0.0
    %868 = vmatprep.subr.mxu0 0.0
    %869 = vmatpush1.msra.mxu0 0.0
    %870 = vmatprep.subr.mxu0 0.0
    %871 = vmatpush1.msra.mxu0 0.0
    %872 = vmatprep.subr.mxu0 0.0
    %873 = vmatpush1.msra.mxu0 0.0
    %874 = vmatprep.subr.mxu0 0.0
    %875 = vmatpush1.msra.mxu0 0.0
    %876 = vmatprep.subr.mxu0 0.0
    %877 = vmatpush1.msra.mxu0 0.0
    %878 = vmatprep.mubr.f32.mxu0 0.0
    %879 = vmatmul.mubr.f32.gmra.mrb[0].mxu0 %v812
    %v880 = vpop.f32.mrb[0].mxu0
    %v881 = vadd.f32 0.0, %v880
    %v882 = vpop.f32.mrb[0].mxu0
    %v883 = vadd.f32 0.0, %v882
    %884 = vdwg.mxu0
    %v886 = vrot.slane %v881, 2
    %v888 = vadd.f32 %v164, %v886
    %v889 = vlaneseq
    %v890 = vshrl.u32 %v889, 7
    %v891 = vsub.s32 0, %v890
    %v892 = vrot.slane %v883, %v891
    %v893 = vmul.f32 %v155, %v892
    %v894 = vsub.f32 %v155, %v892
    %896 = vrot.lane.b32.xlu0 %v894, 32
    %v897 = vpop.permute.xlu0 %896
    %v899 = vsel %vm82, %v893, %v897
    %v900 = vtanh.pop %v899
    %v901 = vmul.f32 %v900, %v389
    %v902 = vsel %vm392, %v901, 0.0
    %903 = vadd.xlane.f32.xlu0 %v902
    %v904 = vpop.xlane.xlu0 %903
    %v905 = vadd.f32 %v904, %v396
    %vm906 = vcmp.lt.s32.totalorder %v176, 5
    %v907 = vsub.f32 %v905, 10000.0
    %v908 = vsel %vm906, %v905, %v907
    %v909 = vrot.slane %v908, 4
    %v910 = vmax.f32 %v908, %v909
    %v911 = vrot.slane %v910, 2
    %v912 = vmax.f32 %v910, %v911
    %v913 = vrot.slane %v912, 1
    %v914 = vmax.f32 %v912, %v913
    %s915 = vtos %v914
    %v916 = vstv %s915
    %vm917 = vcmp.eq.f32.partialorder %v908, %v916
    %v918 = vsel %vm917, %v176, 8
    %v919 = vrot.slane %v918, 4
    %vm920 = vcmp.lt.s32.totalorder %v918, %v919
    %v921 = vsel %vm920, %v918, %v919
    %v922 = vrot.slane %v921, 2
    %vm923 = vcmp.lt.s32.totalorder %v921, %v922
    %v924 = vsel %vm923, %v921, %v922
    %v925 = vrot.slane %v924, 1
    %vm926 = vcmp.lt.s32.totalorder %v924, %v925
    %v927 = vsel %vm926, %v924, %v925
    %s928 = vtos %v927
    %v929 = vsub.f32 %v905, %v916
    %v930 = vsel %vm906, %v929, -1e+30
    %v931 = vmul.f32 %v930, 1.442695
    %v932 = vpow.pop %v931
    %v933 = vsel %vm425, %v932, 0.0
    %934 = vadd.xlane.f32.xlu0 %v933
    %v935 = vpop.xlane.xlu0 %934
    %v936 = vrot.slane %v935, 4
    %v937 = vadd.f32 %v935, %v936
    %v938 = vrot.slane %v937, 2
    %v939 = vadd.f32 %v937, %v938
    %v940 = vrot.slane %v939, 1
    %v941 = vadd.f32 %v939, %v940
    %s942 = vtos %v941
    %v943 = vstv %s942
    %v944 = vlog2.pop %v943
    %v945 = vmul.f32 %v944, 0.6931472
    %s946 = vtos %v945
    %s947 = sadd.f32 %s778, %s946
    %s948 = scalar_lea.smem [#allocation9], 5
    %949 = sst [smem:[%s948]] %s928
    %v950 = vxor.u32 %v888, 2147483648
    %v951 = vmul.f32 %v950, 1.442695
    %v952 = vpow.pop %v951
    %v953 = vadd.f32 %v952, 1.0
    %v954 = vrcp.pop %v953
    %v955 = vmul.f32 1.0, %v954
    %v956 = vtanh.pop %v888
    %v958 = vrot.slane %v801, 7
    %v960 = vmul.f32 %v955, %v958
    %962 = vrot.lane.b32.xlu0 %v956, 32
    %v963 = vpop.permute.xlu0 %962
    %v965 = vmul.f32 %v955, %v963
    %967 = vrot.lane.b32.xlu0 %v965, 32
    %v968 = vpop.permute.xlu0 %967
    %v970 = vadd.f32 %v960, %v968
    %v971 = vtanh.pop %v970
    %973 = vrot.lane.b32.xlu0 %v971, 32
    %v974 = vpop.permute.xlu0 %973
    %v976 = vmul.f32 %v955, %v974
    %v978 = vrot.slane %v976, 6
    %979 = vrot.lane.b32.xlu0 %v978, 64
    %v980 = vpop.permute.xlu0 %979
    %v981 = vsel %vm82, %v980, 0
    %983 = vmatprep.subr.mxu0 %v166
    %984 = vmatpush1.msra.mxu0 %v165
    %985 = vmatprep.subr.mxu0 %v168
    %986 = vmatpush1.msra.mxu0 %v167
    %987 = vmatprep.subr.mxu0 %v170
    %988 = vmatpush1.msra.mxu0 %v169
    %989 = vmatprep.subr.mxu0 %v172
    %990 = vmatpush1.msra.mxu0 %v171
    %991 = vmatprep.subr.mxu0 0.0
    %992 = vmatpush1.msra.mxu0 0.0
    %993 = vmatprep.subr.mxu0 0.0
    %994 = vmatpush1.msra.mxu0 0.0
    %995 = vmatprep.subr.mxu0 0.0
    %996 = vmatpush1.msra.mxu0 0.0
    %997 = vmatprep.subr.mxu0 0.0
    %998 = vmatpush1.msra.mxu0 0.0
    %999 = vmatprep.subr.mxu0 0.0
    %1000 = vmatpush1.msra.mxu0 0.0
    %1001 = vmatprep.subr.mxu0 0.0
    %1002 = vmatpush1.msra.mxu0 0.0
    %1003 = vmatprep.subr.mxu0 0.0
    %1004 = vmatpush1.msra.mxu0 0.0
    %1005 = vmatprep.subr.mxu0 0.0
    %1006 = vmatpush1.msra.mxu0 0.0
    %1007 = vmatprep.subr.mxu0 0.0
    %1008 = vmatpush1.msra.mxu0 0.0
    %1009 = vmatprep.subr.mxu0 0.0
    %1010 = vmatpush1.msra.mxu0 0.0
    %1011 = vmatprep.subr.mxu0 0.0
    %1012 = vmatpush1.msra.mxu0 0.0
    %1013 = vmatprep.subr.mxu0 0.0
    %1014 = vmatpush1.msra.mxu0 0.0
    %1015 = vmatprep.subr.mxu0 0.0
    %1016 = vmatpush1.msra.mxu0 0.0
    %1017 = vmatprep.subr.mxu0 0.0
    %1018 = vmatpush1.msra.mxu0 0.0
    %1019 = vmatprep.subr.mxu0 0.0
    %1020 = vmatpush1.msra.mxu0 0.0
    %1021 = vmatprep.subr.mxu0 0.0
    %1022 = vmatpush1.msra.mxu0 0.0
    %1023 = vmatprep.subr.mxu0 0.0
    %1024 = vmatpush1.msra.mxu0 0.0
    %1025 = vmatprep.subr.mxu0 0.0
    %1026 = vmatpush1.msra.mxu0 0.0
    %1027 = vmatprep.subr.mxu0 0.0
    %1028 = vmatpush1.msra.mxu0 0.0
    %1029 = vmatprep.subr.mxu0 0.0
    %1030 = vmatpush1.msra.mxu0 0.0
    %1031 = vmatprep.subr.mxu0 0.0
    %1032 = vmatpush1.msra.mxu0 0.0
    %1033 = vmatprep.subr.mxu0 0.0
    %1034 = vmatpush1.msra.mxu0 0.0
    %1035 = vmatprep.subr.mxu0 0.0
    %1036 = vmatpush1.msra.mxu0 0.0
    %1037 = vmatprep.subr.mxu0 0.0
    %1038 = vmatpush1.msra.mxu0 0.0
    %1039 = vmatprep.subr.mxu0 0.0
    %1040 = vmatpush1.msra.mxu0 0.0
    %1041 = vmatprep.subr.mxu0 0.0
    %1042 = vmatpush1.msra.mxu0 0.0
    %1043 = vmatprep.subr.mxu0 0.0
    %1044 = vmatpush1.msra.mxu0 0.0
    %1045 = vmatprep.subr.mxu0 0.0
    %1046 = vmatpush1.msra.mxu0 0.0
    %1047 = vmatprep.mubr.f32.mxu0 0.0
    %1048 = vmatmul.mubr.f32.gmra.mrb[0].mxu0 %v981
    %v1049 = vpop.f32.mrb[0].mxu0
    %v1050 = vadd.f32 0.0, %v1049
    %v1051 = vpop.f32.mrb[0].mxu0
    %v1052 = vadd.f32 0.0, %v1051
    %1053 = vdwg.mxu0
    %v1055 = vrot.slane %v1050, 1
    %v1057 = vadd.f32 %v164, %v1055
    %v1058 = vlaneseq
    %v1059 = vshrl.u32 %v1058, 7
    %v1060 = vsub.s32 0, %v1059
    %v1061 = vrot.slane %v1052, %v1060
    %v1062 = vmul.f32 %v155, %v1061
    %v1063 = vsub.f32 %v155, %v1061
    %1065 = vrot.lane.b32.xlu0 %v1063, 32
    %v1066 = vpop.permute.xlu0 %1065
    %v1068 = vsel %vm82, %v1062, %v1066
    %v1069 = vtanh.pop %v1068
    %v1070 = vmul.f32 %v1069, %v389
    %v1071 = vsel %vm392, %v1070, 0.0
    %1072 = vadd.xlane.f32.xlu0 %v1071
    %v1073 = vpop.xlane.xlu0 %1072
    %v1074 = vadd.f32 %v1073, %v396
    %vm1075 = vcmp.lt.s32.totalorder %v176, 6
    %v1076 = vsub.f32 %v1074, 10000.0
    %v1077 = vsel %vm1075, %v1074, %v1076
    %v1078 = vrot.slane %v1077, 4
    %v1079 = vmax.f32 %v1077, %v1078
    %v1080 = vrot.slane %v1079, 2
    %v1081 = vmax.f32 %v1079, %v1080
    %v1082 = vrot.slane %v1081, 1
    %v1083 = vmax.f32 %v1081, %v1082
    %s1084 = vtos %v1083
    %v1085 = vstv %s1084
    %vm1086 = vcmp.eq.f32.partialorder %v1077, %v1085
    %v1087 = vsel %vm1086, %v176, 8
    %v1088 = vrot.slane %v1087, 4
    %vm1089 = vcmp.lt.s32.totalorder %v1087, %v1088
    %v1090 = vsel %vm1089, %v1087, %v1088
    %v1091 = vrot.slane %v1090, 2
    %vm1092 = vcmp.lt.s32.totalorder %v1090, %v1091
    %v1093 = vsel %vm1092, %v1090, %v1091
    %v1094 = vrot.slane %v1093, 1
    %vm1095 = vcmp.lt.s32.totalorder %v1093, %v1094
    %v1096 = vsel %vm1095, %v1093, %v1094
    %s1097 = vtos %v1096
    %v1098 = vsub.f32 %v1074, %v1085
    %v1099 = vsel %vm1075, %v1098, -1e+30
    %v1100 = vmul.f32 %v1099, 1.442695
    %v1101 = vpow.pop %v1100
    %v1102 = vsel %vm425, %v1101, 0.0
    %1103 = vadd.xlane.f32.xlu0 %v1102
    %v1104 = vpop.xlane.xlu0 %1103
    %v1105 = vrot.slane %v1104, 4
    %v1106 = vadd.f32 %v1104, %v1105
    %v1107 = vrot.slane %v1106, 2
    %v1108 = vadd.f32 %v1106, %v1107
    %v1109 = vrot.slane %v1108, 1
    %v1110 = vadd.f32 %v1108, %v1109
    %s1111 = vtos %v1110
    %v1112 = vstv %s1111
    %v1113 = vlog2.pop %v1112
    %v1114 = vmul.f32 %v1113, 0.6931472
    %s1115 = vtos %v1114
    %s1116 = sadd.f32 %s947, %s1115
    %s1117 = scalar_lea.smem [#allocation9], 6
    %1118 = sst [smem:[%s1117]] %s1097
    %v1119 = vxor.u32 %v1057, 2147483648
    %v1120 = vmul.f32 %v1119, 1.442695
    %v1121 = vpow.pop %v1120
    %v1122 = vadd.f32 %v1121, 1.0
    %v1123 = vrcp.pop %v1122
    %v1124 = vmul.f32 1.0, %v1123
    %v1125 = vtanh.pop %v1057
    %v1127 = vrot.slane %v970, 7
    %v1129 = vmul.f32 %v1124, %v1127
    %1131 = vrot.lane.b32.xlu0 %v1125, 32
    %v1132 = vpop.permute.xlu0 %1131
    %v1134 = vmul.f32 %v1124, %v1132
    %1136 = vrot.lane.b32.xlu0 %v1134, 32
    %v1137 = vpop.permute.xlu0 %1136
    %v1139 = vadd.f32 %v1129, %v1137
    %v1140 = vtanh.pop %v1139
    %1142 = vrot.lane.b32.xlu0 %v1140, 32
    %v1143 = vpop.permute.xlu0 %1142
    %v1145 = vmul.f32 %v1124, %v1143
    %v1147 = vrot.slane %v1145, 7
    %1148 = vrot.lane.b32.xlu0 %v1147, 64
    %v1149 = vpop.permute.xlu0 %1148
    %v1150 = vsel %vm82, %v1149, 0
    %1152 = vmatprep.subr.mxu0 %v166
    %1153 = vmatpush1.msra.mxu0 %v165
    %1154 = vmatprep.subr.mxu0 %v168
    %1155 = vmatpush1.msra.mxu0 %v167
    %1156 = vmatprep.subr.mxu0 %v170
    %1157 = vmatpush1.msra.mxu0 %v169
    %1158 = vmatprep.subr.mxu0 %v172
    %1159 = vmatpush1.msra.mxu0 %v171
    %1160 = vmatprep.subr.mxu0 0.0
    %1161 = vmatpush1.msra.mxu0 0.0
    %1162 = vmatprep.subr.mxu0 0.0
    %1163 = vmatpush1.msra.mxu0 0.0
    %1164 = vmatprep.subr.mxu0 0.0
    %1165 = vmatpush1.msra.mxu0 0.0
    %1166 = vmatprep.subr.mxu0 0.0
    %1167 = vmatpush1.msra.mxu0 0.0
    %1168 = vmatprep.subr.mxu0 0.0
    %1169 = vmatpush1.msra.mxu0 0.0
    %1170 = vmatprep.subr.mxu0 0.0
    %1171 = vmatpush1.msra.mxu0 0.0
    %1172 = vmatprep.subr.mxu0 0.0
    %1173 = vmatpush1.msra.mxu0 0.0
    %1174 = vmatprep.subr.mxu0 0.0
    %1175 = vmatpush1.msra.mxu0 0.0
    %1176 = vmatprep.subr.mxu0 0.0
    %1177 = vmatpush1.msra.mxu0 0.0
    %1178 = vmatprep.subr.mxu0 0.0
    %1179 = vmatpush1.msra.mxu0 0.0
    %1180 = vmatprep.subr.mxu0 0.0
    %1181 = vmatpush1.msra.mxu0 0.0
    %1182 = vmatprep.subr.mxu0 0.0
    %1183 = vmatpush1.msra.mxu0 0.0
    %1184 = vmatprep.subr.mxu0 0.0
    %1185 = vmatpush1.msra.mxu0 0.0
    %1186 = vmatprep.subr.mxu0 0.0
    %1187 = vmatpush1.msra.mxu0 0.0
    %1188 = vmatprep.subr.mxu0 0.0
    %1189 = vmatpush1.msra.mxu0 0.0
    %1190 = vmatprep.subr.mxu0 0.0
    %1191 = vmatpush1.msra.mxu0 0.0
    %1192 = vmatprep.subr.mxu0 0.0
    %1193 = vmatpush1.msra.mxu0 0.0
    %1194 = vmatprep.subr.mxu0 0.0
    %1195 = vmatpush1.msra.mxu0 0.0
    %1196 = vmatprep.subr.mxu0 0.0
    %1197 = vmatpush1.msra.mxu0 0.0
    %1198 = vmatprep.subr.mxu0 0.0
    %1199 = vmatpush1.msra.mxu0 0.0
    %1200 = vmatprep.subr.mxu0 0.0
    %1201 = vmatpush1.msra.mxu0 0.0
    %1202 = vmatprep.subr.mxu0 0.0
    %1203 = vmatpush1.msra.mxu0 0.0
    %1204 = vmatprep.subr.mxu0 0.0
    %1205 = vmatpush1.msra.mxu0 0.0
    %1206 = vmatprep.subr.mxu0 0.0
    %1207 = vmatpush1.msra.mxu0 0.0
    %1208 = vmatprep.subr.mxu0 0.0
    %1209 = vmatpush1.msra.mxu0 0.0
    %1210 = vmatprep.subr.mxu0 0.0
    %1211 = vmatpush1.msra.mxu0 0.0
    %1212 = vmatprep.subr.mxu0 0.0
    %1213 = vmatpush1.msra.mxu0 0.0
    %1214 = vmatprep.subr.mxu0 0.0
    %1215 = vmatpush1.msra.mxu0 0.0
    %1216 = vmatprep.mubr.f32.mxu0 0.0
    %1217 = vmatmul.mubr.f32.gmra.mrb[0].mxu0 %v1150
    %v1218 = vpop.f32.mrb[0].mxu0
    %v1219 = vpop.f32.mrb[0].mxu0
    %v1220 = vadd.f32 0.0, %v1219
    %1221 = vdwg.mxu0
    %v1222 = vlaneseq
    %v1223 = vshrl.u32 %v1222, 7
    %v1224 = vsub.s32 0, %v1223
    %v1225 = vrot.slane %v1220, %v1224
    %v1226 = vmul.f32 %v155, %v1225
    %v1227 = vsub.f32 %v155, %v1225
    %1229 = vrot.lane.b32.xlu0 %v1227, 32
    %v1230 = vpop.permute.xlu0 %1229
    %v1232 = vsel %vm82, %v1226, %v1230
    %v1233 = vtanh.pop %v1232
    %v1234 = vmul.f32 %v1233, %v389
    %v1235 = vsel %vm392, %v1234, 0.0
    %1236 = vadd.xlane.f32.xlu0 %v1235
    %v1237 = vpop.xlane.xlu0 %1236
    %v1238 = vadd.f32 %v1237, %v396
    %vm1239 = vcmp.lt.s32.totalorder %v176, 7
    %v1240 = vsub.f32 %v1238, 10000.0
    %v1241 = vsel %vm1239, %v1238, %v1240
    %v1242 = vrot.slane %v1241, 4
    %v1243 = vmax.f32 %v1241, %v1242
    %v1244 = vrot.slane %v1243, 2
    %v1245 = vmax.f32 %v1243, %v1244
    %v1246 = vrot.slane %v1245, 1
    %v1247 = vmax.f32 %v1245, %v1246
    %s1248 = vtos %v1247
    %v1249 = vstv %s1248
    %vm1250 = vcmp.eq.f32.partialorder %v1241, %v1249
    %v1251 = vsel %vm1250, %v176, 8
    %v1252 = vrot.slane %v1251, 4
    %vm1253 = vcmp.lt.s32.totalorder %v1251, %v1252
    %v1254 = vsel %vm1253, %v1251, %v1252
    %v1255 = vrot.slane %v1254, 2
    %vm1256 = vcmp.lt.s32.totalorder %v1254, %v1255
    %v1257 = vsel %vm1256, %v1254, %v1255
    %v1258 = vrot.slane %v1257, 1
    %vm1259 = vcmp.lt.s32.totalorder %v1257, %v1258
    %v1260 = vsel %vm1259, %v1257, %v1258
    %s1261 = vtos %v1260
    %v1262 = vsub.f32 %v1238, %v1249
    %v1263 = vsel %vm1239, %v1262, -1e+30
    %v1264 = vmul.f32 %v1263, 1.442695
    %v1265 = vpow.pop %v1264
    %v1266 = vsel %vm425, %v1265, 0.0
    %1267 = vadd.xlane.f32.xlu0 %v1266
    %v1268 = vpop.xlane.xlu0 %1267
    %v1269 = vrot.slane %v1268, 4
    %v1270 = vadd.f32 %v1268, %v1269
    %v1271 = vrot.slane %v1270, 2
    %v1272 = vadd.f32 %v1270, %v1271
    %v1273 = vrot.slane %v1272, 1
    %v1274 = vadd.f32 %v1272, %v1273
    %s1275 = vtos %v1274
    %v1276 = vstv %s1275
    %v1277 = vlog2.pop %v1276
    %v1278 = vmul.f32 %v1277, 0.6931472
    %s1279 = vtos %v1278
    %s1280 = sadd.f32 %s1116, %s1279
    %s1281 = scalar_lea.smem [#allocation9], 7
    %1282 = sst [smem:[%s1281]] %s1261
    %v1283 = vrcp.pop 6.00001
    %s1284 = vtos %v1283
    %s1285 = smul.f32 %s1280, %s1284
    %s1286 = scalar_lea.smem [#allocation10], 0
    %1287 = sst [smem:[%s1286]] %s1285
    // Predicated region
    $region46: #{tpu_custom_call.1} parent=1 // pred_check
      _
    $region47: #{tpu_custom_call.1} parent=1 // pred_check_branch
      %1289 = sbr.rel (0) target = $region49
    $region48: #{tpu_custom_call.1} parent=1 // pred_region
      %s1291 = ssub.s32 16, 16
      %1292 = vsyncadd [#allocation5], %s1291
      %1295 = dma.smem_to_hbm [#allocation9], 16, %s8, [#allocation5]
    $region49: #{tpu_custom_call.1} parent=1 // pred_fallthru
      _
    // Predicated region
    $region50: #{tpu_custom_call.1} parent=1 // pred_check
      _
    $region51: #{tpu_custom_call.1} parent=1 // pred_check_branch
      %1297 = sbr.rel (0) target = $region53
    $region52: #{tpu_custom_call.1} parent=1 // pred_region
      %s1299 = ssub.s32 16, 16
      %1300 = vsyncadd [#allocation11], %s1299
      %1303 = dma.smem_to_hbm [#allocation10], 16, %s9, [#allocation11]
    $region53: #{tpu_custom_call.1} parent=1 // pred_fallthru
      _
    // Predicated region
    $region54: #{tpu_custom_call.1} parent=1 // pred_check
      _
    $region55: #{tpu_custom_call.1} parent=1 // pred_check_branch
      %1305 = sbr.rel (0) target = $region57
    $region56: #{tpu_custom_call.1} parent=1 // pred_region
      %1306 = dma.done [#allocation5], 16
    $region57: #{tpu_custom_call.1} parent=1 // pred_fallthru
      _
    // Predicated region
    $region58: #{tpu_custom_call.1} parent=1 // pred_check
      _
    $region59: #{tpu_custom_call.1} parent=1 // pred_check_branch
      %1308 = sbr.rel (0) target = $region61
    $region60: #{tpu_custom_call.1} parent=1 // pred_region
      %1309 = dma.done [#allocation11], 16
    $region61: #{tpu_custom_call.1} parent=1 // pred_fallthru
      _
    %1310 = sfence
    %1311 = vsyncpa [#allocation4], 1
    %1312 = vsyncpa [#allocation7], 1
    %1313 = vsyncpa [#allocation5], 1
    %1314 = vsyncpa [#allocation11], 1

</llo_original>
